<compile_context>
chip_gen: v7x
topology: tpu7x:2x2x1
jax: 0.10.0
libtpu: 0.0.40
codegen_flags: <defaults>
</compile_context>

<pallas_src>
import functools

import jax
import jax.numpy as jnp
from jax import lax
from jax.experimental import pallas as pl
from jax.experimental.pallas import tpu as pltpu


def _round_up(v, m):
    return (v + m - 1) // m * m


def _pick_tiling(n_tokens):
    """Per-generation token-tile size and VMEM limit (v5e/v6e: 128MiB, v7x: 64MiB)."""
    try:
        vmem_cap = int(pltpu.get_tpu_info().vmem_capacity_bytes)
    except Exception:  # conservative fallback (works on every generation)
        vmem_cap = 64 * 1024 * 1024
    tile_cap = 1024 if vmem_cap >= 96 * 1024 * 1024 else 512
    tile_n = min(tile_cap, _round_up(n_tokens, 128))
    vmem_limit = int(min((vmem_cap * 3) // 4, 112 * 1024 * 1024))
    return tile_n, vmem_limit


# ------------------------- fused Pallas kernel ------------------------- #

def _fused_nonlocal_kernel(x_ref, wg_ref, bg_ref, ww_ref, bias_ref, o_ref,
                           key_sc, gx_sc, *, tile_n, ng, dot_dtype,
                           keys_pretransposed):
    """One grid step = one (batch, token-tile).

    x_ref:    (1, N_pad, C)  whole-batch tokens, window element k at rows [k*ng,(k+1)*ng)
    wg_ref:   (C, IC)        g 1x1x1 conv weight (transposed, pre-cast to dot_dtype)
    bg_ref:   (1, IC)        g conv bias (f32)
    ww_ref:   (IC, C)        W 1x1x1 conv weight with BN scale folded in (dot_dtype)
    bias_ref: (1, C)         folded W-conv bias + eval-mode BatchNorm shift (f32)
    o_ref:    (1, tile_n, C) output tokens (residual already added)
    key_sc:   (C, ng) or (ng, C) VMEM  pooled keys   (persist across token tiles)
    gx_sc:    (ng, IC)           VMEM  pooled values (persist across token tiles)
    """
    ti = pl.program_id(1)

    # ---- per-batch prolog: phi = maxpool(x), g = maxpool(conv(x)) + bias ------
    @pl.when(ti == 0)
    def _():
        x_all = x_ref[0, pl.ds(0, 4 * ng), :]                     # (4*ng, C) contiguous
        x0 = x_all[0 * ng:1 * ng]
        x1 = x_all[1 * ng:2 * ng]
        x2 = x_all[2 * ng:3 * ng]
        x3 = x_all[3 * ng:4 * ng]
        phi = jnp.maximum(jnp.maximum(x0, x1), jnp.maximum(x2, x3))
        if keys_pretransposed:
            # one transpose per batch instead of one per token tile
            key_sc[...] = jnp.transpose(phi).astype(key_sc.dtype)  # (C, ng)
        else:
            key_sc[...] = phi.astype(key_sc.dtype)                 # (ng, C)
        # one big-M MXU call for the g conv, then pool (bias commutes with max)
        g_all = jnp.dot(x_all.astype(dot_dtype), wg_ref[...],
                        preferred_element_type=jnp.float32)        # (4*ng, IC) f32
        g0 = g_all[0 * ng:1 * ng]
        g1 = g_all[1 * ng:2 * ng]
        g2 = g_all[2 * ng:3 * ng]
        g3 = g_all[3 * ng:4 * ng]
        gx = jnp.maximum(jnp.maximum(g0, g1), jnp.maximum(g2, g3)) + bg_ref[...]
        gx_sc[...] = gx.astype(gx_sc.dtype)

    # ---- gaussian non-local attention for this token tile ---------------------
    start = pl.multiple_of(ti * tile_n, tile_n)
    theta = x_ref[0, pl.ds(start, tile_n), :].astype(jnp.float32)  # (TN, C) queries
    theta_d = theta.astype(dot_dtype)
    if keys_pretransposed:
        f = jnp.dot(theta_d, key_sc[...],
                    preferred_element_type=jnp.float32)            # (TN, ng)
    else:
        f = lax.dot_general(theta_d, key_sc[...], (((1,), (1,)), ((), ())),
                            preferred_element_type=jnp.float32)    # (TN, ng)
    m = jnp.max(f, axis=-1, keepdims=True)
    p = jnp.exp(f - m)                                             # unnormalised softmax
    denom = jnp.sum(p, axis=-1, keepdims=True)
    y = jnp.dot(p.astype(dot_dtype), gx_sc[...],
                preferred_element_type=jnp.float32)                # (TN, IC)
    y = y * pl.reciprocal(denom, approx=True)                      # normalise on EUP
    wy = jnp.dot(y.astype(dot_dtype), ww_ref[...],
                 preferred_element_type=jnp.float32)               # (TN, C)
    o_ref[0] = (wy + bias_ref[...] + theta).astype(o_ref.dtype)    # BN shift + residual


def _fused_nonlocal(x_tok, w_g, b_g, w_Ws, bias, *, ng, tile_n, dot_dtype,
                    vmem_limit):
    B, N_pad, C = x_tok.shape
    IC = w_g.shape[1]
    nt = N_pad // tile_n

    # Pre-transposed keys only on lane-aligned (production) channel counts;
    # small/demo C uses the flash-style q.k^T contraction instead.
    keys_pretransposed = (C % 128 == 0)
    key_shape = (C, ng) if keys_pretransposed else (ng, C)

    single = dict(pipeline_mode=pl.Buffered(1))  # block index constant across ti
    kernel = functools.partial(
        _fused_nonlocal_kernel, tile_n=tile_n, ng=ng, dot_dtype=dot_dtype,
        keys_pretransposed=keys_pretransposed)

    return pl.pallas_call(
        kernel,
        out_shape=jax.ShapeDtypeStruct((B, N_pad, C), x_tok.dtype),
        grid=(B, nt),
        in_specs=[
            # whole-batch token block: read from HBM once per batch; queries and
            # pooling windows are both sliced out of it in-kernel.
            pl.BlockSpec((1, N_pad, C), lambda bi, ti: (bi, 0, 0), **single),
            pl.BlockSpec((C, IC), lambda bi, ti: (0, 0), **single),
            pl.BlockSpec((1, IC), lambda bi, ti: (0, 0), **single),
            pl.BlockSpec((IC, C), lambda bi, ti: (0, 0), **single),
            pl.BlockSpec((1, C), lambda bi, ti: (0, 0), **single),
        ],
        out_specs=pl.BlockSpec((1, tile_n, C), lambda bi, ti: (bi, ti, 0)),
        scratch_shapes=[
            pltpu.VMEM(key_shape, dot_dtype),   # pooled keys   (phi, maybe transposed)
            pltpu.VMEM((ng, IC), dot_dtype),    # pooled values (g)
        ],
        compiler_params=pltpu.CompilerParams(
            # B shards across TensorCores (v7x megacore); token axis must stay
            # sequential because the key/value scratch is built once per batch.
            dimension_semantics=("parallel", "arbitrary"),
            vmem_limit_bytes=vmem_limit,
        ),
    )(x_tok, w_g, b_g, w_Ws, bias)


# ------------------------- forward wrapper ------------------------- #

def non_local_block_forward(x, params, *, dot_dtype=jnp.bfloat16):
    """x: (B, C, T, H, W) float32 (PyTorch NCDHW). Returns z of the same shape.

    Production note: C and IC should be multiples of 128 (channels sit on vreg
    lanes / MXU K,N dims); smaller values work (demo) but underutilise the MXU.
    """
    B, C, T, H, W = x.shape
    assert H % 2 == 0 and W % 2 == 0, "H and W must be even for MaxPool3d((1,2,2))"
    Hp, Wp = H // 2, W // 2
    N = T * H * W
    Ng = T * Hp * Wp
    IC = params["w_g"].shape[1]

    # Single layout pass: NCDHW -> (B, dh, dw, T, Hp, Wp, C) -> (B, N, C) tokens.
    # Attention is permutation-invariant over tokens, so any consistent order is
    # valid; this one puts window element k of every 2x2 pooling window at rows
    # [k*Ng, (k+1)*Ng) so the kernel pools with contiguous slice maxima.
    x_perm = jnp.transpose(x.reshape(B, C, T, Hp, 2, Wp, 2), (0, 4, 6, 2, 3, 5, 1))
    x_tok = x_perm.reshape(B, N, C)

    tile_n, vmem_limit = _pick_tiling(N)
    N_pad = _round_up(N, tile_n)
    if N_pad != N:
        # padded query rows produce garbage rows that are sliced off below; the
        # pooled key/value set only ever reads the first 4*Ng = N real rows.
        x_tok = jnp.pad(x_tok, ((0, 0), (0, N_pad - N), (0, 0)))

    # Fold the W-conv bias and eval-mode BatchNorm into the W weight / one bias,
    # and pre-cast the matmul weights to the MXU operand dtype.
    s = params["bn_gamma"] * lax.rsqrt(params["bn_var"] + 1e-5)
    w_Ws = (params["w_W"] * s[None, :]).astype(dot_dtype)
    bias = (s * (params["b_W"] - params["bn_mean"]) + params["bn_beta"]).reshape(1, C)
    w_g = params["w_g"].astype(dot_dtype)
    b_g = params["b_g"].reshape(1, IC)

    z_tok = _fused_nonlocal(x_tok, w_g, b_g, w_Ws, bias, ng=Ng, tile_n=tile_n,
                            dot_dtype=dot_dtype, vmem_limit=vmem_limit)

    # Inverse layout pass: token layout -> NCDHW.
    z = z_tok[:, :N, :].reshape(B, 2, 2, T, Hp, Wp, C)
    return jnp.transpose(z, (0, 6, 3, 4, 1, 5, 2)).reshape(B, C, T, H, W)


# ------------------------- pure-JAX reference ------------------------- #

def _maxpool_hw(a):
    # MaxPool3d(kernel_size=(1,2,2)) on (B, C, T, H, W)
    B, C, T, H, W = a.shape
    return a.reshape(B, C, T, H // 2, 2, W // 2, 2).max(axis=(4, 6))


def reference_forward(x, params):
    B, C, T, H, W = x.shape
    N = T * H * W
    IC = params["w_g"].shape[1]
    theta = jnp.transpose(x.reshape(B, C, N), (0, 2, 1))
    g_full = theta @ params["w_g"] + params["b_g"]
    g_feat = jnp.transpose(g_full, (0, 2, 1)).reshape(B, IC, T, H, W)
    g_pool = _maxpool_hw(g_feat)
    Ng = T * (H // 2) * (W // 2)
    gx = jnp.transpose(g_pool.reshape(B, IC, Ng), (0, 2, 1))
    phi = _maxpool_hw(x).reshape(B, C, Ng)
    f = jnp.einsum("bnc,bcm->bnm", theta, phi)
    f_div_c = jax.nn.softmax(f, axis=-1)
    y = jnp.einsum("bnm,bmi->bni", f_div_c, gx)
    wy = y @ params["w_W"] + params["b_W"]
    s = params["bn_gamma"] / jnp.sqrt(params["bn_var"] + 1e-5)
    wy_bn = s * (wy - params["bn_mean"]) + params["bn_beta"]
    z = wy_bn + theta
    return jnp.transpose(z, (0, 2, 1)).reshape(B, C, T, H, W)


# ------------------------- main ------------------------- #

if __name__ == "__main__":
    B, C, T, H, W = 2, 4, 4, 8, 8        # in_channels=4 -> inter_channels=2
    IC = max(C // 2, 1)

    key = jax.random.PRNGKey(0)
    k_x, k_wg, k_bg, k_ww, k_bw, k_gm, k_bt = jax.random.split(key, 7)

    x = jax.random.normal(k_x, (B, C, T, H, W), dtype=jnp.float32)

    params = {
        # g conv: PyTorch weight (IC, C, 1,1,1) stored transposed as (C, IC)
        "w_g": 0.1 * jax.random.normal(k_wg, (C, IC), dtype=jnp.float32),
        "b_g": 0.1 * jax.random.normal(k_bg, (IC,), dtype=jnp.float32),
        # W conv: PyTorch weight (C, IC, 1,1,1) stored transposed as (IC, C)
        "w_W": 0.1 * jax.random.normal(k_ww, (IC, C), dtype=jnp.float32),
        "b_W": 0.1 * jax.random.normal(k_bw, (C,), dtype=jnp.float32),
        # BatchNorm3d (eval mode) -- synthetic nonzero gamma/beta (the module
        # inits them to 0, which would make the whole block an exact identity).
        "bn_gamma": 1.0 + 0.1 * jax.random.normal(k_gm, (C,), dtype=jnp.float32),
        "bn_beta": 0.1 * jax.random.normal(k_bt, (C,), dtype=jnp.float32),
        "bn_mean": jnp.zeros((C,), dtype=jnp.float32),
        "bn_var": jnp.ones((C,), dtype=jnp.float32),
    }

    z_ref = reference_forward(x, params)

    # Default path: bf16 MXU operands, f32 accumulation / softmax / residual.
    z = jax.block_until_ready(non_local_block_forward(x, params))
    assert z.shape == x.shape and z.dtype == x.dtype
    assert jnp.allclose(z, z_ref, rtol=3e-2, atol=3e-2), "bf16 path mismatch"

    # f32 MXU operand path (tighter check; tolerance leaves headroom for the
    # backend's default f32-matmul precision and the approximate reciprocal).
    z32 = jax.block_until_ready(
        non_local_block_forward(x, params, dot_dtype=jnp.float32))
    assert jnp.allclose(z32, z_ref, rtol=1e-2, atol=1e-2), "f32 path mismatch"

    print("KERNEL_OK")
</pallas_src>

<mosaic_0001>
module attributes {stable_mosaic.version = 11 : i64} {
  func.func @_fused_nonlocal_kernel(%arg0: i32, %arg1: i32, %arg2: memref<1x256x4xf32, #tpu.memory_space<vmem>>, %arg3: memref<4x2xbf16, #tpu.memory_space<vmem>>, %arg4: memref<1x2xf32, #tpu.memory_space<vmem>>, %arg5: memref<2x4xbf16, #tpu.memory_space<vmem>>, %arg6: memref<1x4xf32, #tpu.memory_space<vmem>>, %arg7: memref<1x256x4xf32, #tpu.memory_space<vmem>>, %arg8: memref<64x4xbf16, #tpu.memory_space<vmem>>, %arg9: memref<64x2xbf16, #tpu.memory_space<vmem>>) attributes {dimension_semantics = [#tpu.dimension_semantics<parallel>, #tpu.dimension_semantics<arbitrary>], iteration_bounds = array<i64: 2, 1>, scalar_prefetch = 0 : i64, scratch_operands = 2 : i64, tpu.core_type = #tpu.core_type<tc>, window_params = [{pipeline_mode = #tpu.pipeline_mode<synchronous>, transform_indices = @transform_0, window_bounds = array<i64: 1, 256, 4>}, {pipeline_mode = #tpu.pipeline_mode<synchronous>, transform_indices = @transform_1, window_bounds = array<i64: 4, 2>}, {pipeline_mode = #tpu.pipeline_mode<synchronous>, transform_indices = @transform_2, window_bounds = array<i64: 1, 2>}, {pipeline_mode = #tpu.pipeline_mode<synchronous>, transform_indices = @transform_3, window_bounds = array<i64: 2, 4>}, {pipeline_mode = #tpu.pipeline_mode<synchronous>, transform_indices = @transform_4, window_bounds = array<i64: 1, 4>}, {transform_indices = @transform_5, window_bounds = array<i64: 1, 256, 4>}]} {
    %c0_i32 = arith.constant 0 : i32
    %0 = arith.cmpi eq, %arg1, %c0_i32 : i32
    %1 = arith.extui %0 : i1 to i32
    %c0_i32_0 = arith.constant 0 : i32
    %2 = arith.cmpi ne, %1, %c0_i32_0 : i32
    scf.if %2 {
      %c0_17 = arith.constant 0 : index
      %c0_18 = arith.constant 0 : index
      %c0_19 = arith.constant 0 : index
      %34 = vector.load %arg2[%c0_17, %c0_18, %c0_19] : memref<1x256x4xf32, #tpu.memory_space<vmem>>, vector<1x256x4xf32>
      %35 = vector.shape_cast %34 : vector<1x256x4xf32> to vector<256x4xf32>
      %36 = vector.extract_strided_slice %35 {offsets = [0, 0], sizes = [64, 4], strides = [1, 1]} : vector<256x4xf32> to vector<64x4xf32>
      %37 = vector.extract_strided_slice %35 {offsets = [64, 0], sizes = [64, 4], strides = [1, 1]} : vector<256x4xf32> to vector<64x4xf32>
      %38 = vector.extract_strided_slice %35 {offsets = [128, 0], sizes = [64, 4], strides = [1, 1]} : vector<256x4xf32> to vector<64x4xf32>
      %39 = vector.extract_strided_slice %35 {offsets = [192, 0], sizes = [64, 4], strides = [1, 1]} : vector<256x4xf32> to vector<64x4xf32>
      %40 = arith.maximumf %36, %37 : vector<64x4xf32>
      %41 = arith.maximumf %38, %39 : vector<64x4xf32>
      %42 = arith.maximumf %40, %41 : vector<64x4xf32>
      %43 = arith.truncf %42 : vector<64x4xf32> to vector<64x4xbf16>
      %c0_20 = arith.constant 0 : index
      %c0_21 = arith.constant 0 : index
      %44 = vector.load %arg8[%c0_20, %c0_21] : memref<64x4xbf16, #tpu.memory_space<vmem>>, vector<64x4xbf16>
      tpu.vector_store %arg8[%c0_20, %c0_21], %43 {strides = array<i32>} : memref<64x4xbf16, #tpu.memory_space<vmem>>, vector<64x4xbf16>,
      %45 = arith.truncf %35 : vector<256x4xf32> to vector<256x4xbf16>
      %c0_22 = arith.constant 0 : index
      %c0_23 = arith.constant 0 : index
      %46 = vector.load %arg3[%c0_22, %c0_23] : memref<4x2xbf16, #tpu.memory_space<vmem>>, vector<4x2xbf16>
      %cst_24 = arith.constant dense<0.000000e+00> : vector<256x2xf32>
      %47 = tpu.matmul %45, %46, %cst_24 {dimension_numbers = #tpu.dot_dimension_numbers<[1], [0], [0], [1], [0, 0, 1, 1], [], []>} : vector<256x4xbf16>, vector<4x2xbf16>, vector<256x2xf32> -> vector<256x2xf32>
      %48 = vector.extract_strided_slice %47 {offsets = [0, 0], sizes = [64, 2], strides = [1, 1]} : vector<256x2xf32> to vector<64x2xf32>
      %49 = vector.extract_strided_slice %47 {offsets = [64, 0], sizes = [64, 2], strides = [1, 1]} : vector<256x2xf32> to vector<64x2xf32>
      %50 = vector.extract_strided_slice %47 {offsets = [128, 0], sizes = [64, 2], strides = [1, 1]} : vector<256x2xf32> to vector<64x2xf32>
      %51 = vector.extract_strided_slice %47 {offsets = [192, 0], sizes = [64, 2], strides = [1, 1]} : vector<256x2xf32> to vector<64x2xf32>
      %52 = arith.maximumf %48, %49 : vector<64x2xf32>
      %53 = arith.maximumf %50, %51 : vector<64x2xf32>
      %54 = arith.maximumf %52, %53 : vector<64x2xf32>
      %c0_25 = arith.constant 0 : index
      %c0_26 = arith.constant 0 : index
      %55 = vector.load %arg4[%c0_25, %c0_26] : memref<1x2xf32, #tpu.memory_space<vmem>>, vector<1x2xf32>
      %56 = vector.broadcast %55 : vector<1x2xf32> to vector<64x2xf32>
      %57 = arith.addf %54, %56 : vector<64x2xf32>
      %58 = arith.truncf %57 : vector<64x2xf32> to vector<64x2xbf16>
      %c0_27 = arith.constant 0 : index
      %c0_28 = arith.constant 0 : index
      %59 = vector.load %arg9[%c0_27, %c0_28] : memref<64x2xbf16, #tpu.memory_space<vmem>>, vector<64x2xbf16>
      tpu.vector_store %arg9[%c0_27, %c0_28], %58 {strides = array<i32>} : memref<64x2xbf16, #tpu.memory_space<vmem>>, vector<64x2xbf16>,
    } else {
    }
    %c256_i32 = arith.constant 256 : i32
    %3 = arith.muli %arg1, %c256_i32 : i32
    %4 = tpu.assume_multiple %3, 256 : i32
    %c0 = arith.constant 0 : index
    %5 = arith.index_cast %4 : i32 to index
    %c0_1 = arith.constant 0 : index
    %6 = vector.load %arg2[%c0, %5, %c0_1] : memref<1x256x4xf32, #tpu.memory_space<vmem>>, vector<1x256x4xf32>
    %7 = vector.shape_cast %6 : vector<1x256x4xf32> to vector<256x4xf32>
    %8 = arith.truncf %7 : vector<256x4xf32> to vector<256x4xbf16>
    %c0_2 = arith.constant 0 : index
    %c0_3 = arith.constant 0 : index
    %9 = vector.load %arg8[%c0_2, %c0_3] : memref<64x4xbf16, #tpu.memory_space<vmem>>, vector<64x4xbf16>
    %cst = arith.constant dense<0.000000e+00> : vector<256x64xf32>
    %10 = tpu.matmul %8, %9, %cst {dimension_numbers = #tpu.dot_dimension_numbers<[1], [1], [0], [0], [0, 0, 1, 0], [], []>} : vector<256x4xbf16>, vector<64x4xbf16>, vector<256x64xf32> -> vector<256x64xf32>
    %cst_4 = arith.constant dense<0xFF800000> : vector<256xf32>
    %11 = vector.multi_reduction <maximumf>, %10, %cst_4 [1] : vector<256x64xf32> to vector<256xf32>
    %12 = vector.shape_cast %11 : vector<256xf32> to vector<256x1xf32>
    %13 = vector.broadcast %12 : vector<256x1xf32> to vector<256x64xf32>
    %14 = arith.subf %10, %13 : vector<256x64xf32>
    %15 = math.exp %14 : vector<256x64xf32>
    %cst_5 = arith.constant dense<0.000000e+00> : vector<256xf32>
    %16 = vector.multi_reduction <add>, %15, %cst_5 [1] : vector<256x64xf32> to vector<256xf32>
    %17 = vector.shape_cast %16 : vector<256xf32> to vector<256x1xf32>
    %18 = arith.truncf %15 : vector<256x64xf32> to vector<256x64xbf16>
    %c0_6 = arith.constant 0 : index
    %c0_7 = arith.constant 0 : index
    %19 = vector.load %arg9[%c0_6, %c0_7] : memref<64x2xbf16, #tpu.memory_space<vmem>>, vector<64x2xbf16>
    %cst_8 = arith.constant dense<0.000000e+00> : vector<256x2xf32>
    %20 = tpu.matmul %18, %19, %cst_8 {dimension_numbers = #tpu.dot_dimension_numbers<[1], [0], [0], [1], [0, 0, 1, 1], [], []>} : vector<256x64xbf16>, vector<64x2xbf16>, vector<256x2xf32> -> vector<256x2xf32>
    %21 = tpu.reciprocal %17 {approx = true} : vector<256x1xf32> -> vector<256x1xf32>
    %22 = vector.broadcast %21 : vector<256x1xf32> to vector<256x2xf32>
    %23 = arith.mulf %20, %22 : vector<256x2xf32>
    %24 = arith.truncf %23 : vector<256x2xf32> to vector<256x2xbf16>
    %c0_9 = arith.constant 0 : index
    %c0_10 = arith.constant 0 : index
    %25 = vector.load %arg5[%c0_9, %c0_10] : memref<2x4xbf16, #tpu.memory_space<vmem>>, vector<2x4xbf16>
    %cst_11 = arith.constant dense<0.000000e+00> : vector<256x4xf32>
    %26 = tpu.matmul %24, %25, %cst_11 {dimension_numbers = #tpu.dot_dimension_numbers<[1], [0], [0], [1], [0, 0, 1, 1], [], []>} : vector<256x2xbf16>, vector<2x4xbf16>, vector<256x4xf32> -> vector<256x4xf32>
    %c0_12 = arith.constant 0 : index
    %c0_13 = arith.constant 0 : index
    %27 = vector.load %arg6[%c0_12, %c0_13] : memref<1x4xf32, #tpu.memory_space<vmem>>, vector<1x4xf32>
    %28 = vector.broadcast %27 : vector<1x4xf32> to vector<256x4xf32>
    %29 = arith.addf %26, %28 : vector<256x4xf32>
    %30 = arith.addf %29, %7 : vector<256x4xf32>
    %c0_14 = arith.constant 0 : index
    %c0_15 = arith.constant 0 : index
    %c0_16 = arith.constant 0 : index
    %31 = vector.load %arg7[%c0_14, %c0_15, %c0_16] : memref<1x256x4xf32, #tpu.memory_space<vmem>>, vector<1x256x4xf32>
    %32 = vector.shape_cast %31 : vector<1x256x4xf32> to vector<256x4xf32>
    %33 = vector.shape_cast %30 : vector<256x4xf32> to vector<1x256x4xf32>
    tpu.vector_store %arg7[%c0_14, %c0_15, %c0_16], %33 {strides = array<i32>} : memref<1x256x4xf32, #tpu.memory_space<vmem>>, vector<1x256x4xf32>,
    return
  }
  func.func @transform_0(%arg0: i32, %arg1: i32) -> (i32, i32, i32) {
    %c0_i32 = arith.constant 0 : i32
    %c0_i32_0 = arith.constant 0 : i32
    %c0_i32_1 = arith.constant 0 : i32
    return %arg0, %c0_i32, %c0_i32_0 : i32, i32, i32
  }
  func.func @transform_1(%arg0: i32, %arg1: i32) -> (i32, i32) {
    %c0_i32 = arith.constant 0 : i32
    %c0_i32_0 = arith.constant 0 : i32
    %c0_i32_1 = arith.constant 0 : i32
    return %c0_i32, %c0_i32_0 : i32, i32
  }
  func.func @transform_2(%arg0: i32, %arg1: i32) -> (i32, i32) {
    %c0_i32 = arith.constant 0 : i32
    %c0_i32_0 = arith.constant 0 : i32
    %c0_i32_1 = arith.constant 0 : i32
    return %c0_i32, %c0_i32_0 : i32, i32
  }
  func.func @transform_3(%arg0: i32, %arg1: i32) -> (i32, i32) {
    %c0_i32 = arith.constant 0 : i32
    %c0_i32_0 = arith.constant 0 : i32
    %c0_i32_1 = arith.constant 0 : i32
    return %c0_i32, %c0_i32_0 : i32, i32
  }
  func.func @transform_4(%arg0: i32, %arg1: i32) -> (i32, i32) {
    %c0_i32 = arith.constant 0 : i32
    %c0_i32_0 = arith.constant 0 : i32
    %c0_i32_1 = arith.constant 0 : i32
    return %c0_i32, %c0_i32_0 : i32, i32
  }
  func.func @transform_5(%arg0: i32, %arg1: i32) -> (i32, i32, i32) {
    %c0_i32 = arith.constant 0 : i32
    %c0_i32_0 = arith.constant 0 : i32
    return %arg0, %arg1, %c0_i32 : i32, i32, i32
  }
}

</mosaic_0001>

<llo_original>
// kernel: tpu_custom_call.1
$region0: #{tpu_custom_call.1}
  #allocation0 [shape = 'u32[]', space=smem, size = 0x4, offset = 0x4, fixed_abs, tag = 'smem constant byte address 0x4 - core index']
  #allocation1 [shape = 'u32[144,128]{1,0:T(1,128)}', space=vmem, size = 0x12000, scoped, tag = 'internal scratch']
  #allocation2 [shape = 'bf16[64,4]{1,0:T(16,128)(2,1)}', space=vmem, size = 0x4000, scoped, tag = 'scratch operand']
  #allocation3 [shape = 'bf16[64,2]{1,0:T(16,128)(2,1)}', space=vmem, size = 0x4000, scoped, tag = 'scratch operand']
  %s0 = inlined_call_operand.vmem [shape: f32[2,256,4], index: 0, kind: input, shape index: {}]
  %s1 = inlined_call_operand.vmem [shape: bf16[4,2], index: 1, kind: input, shape index: {}]
  %s2 = inlined_call_operand.vmem [shape: f32[1,2], index: 2, kind: input, shape index: {}]
  %s3 = inlined_call_operand.vmem [shape: bf16[2,4], index: 3, kind: input, shape index: {}]
  %s4 = inlined_call_operand.vmem [shape: f32[1,4], index: 4, kind: input, shape index: {}]
  %s5 = inlined_call_operand.vmem [shape: f32[2,256,4], index: 5, kind: output, shape index: {}]
  %s6 = sld [smem:[#allocation0]]
  $region57: #{tpu_custom_call.1} parent=0
    _
  %s8 = ssub.s32 1, %s6
  %s9 = scalar_select 0, %s8, %s6
  loop: start=0, step=1, limit=4
  $region2: #{tpu_custom_call.1} parent=0 // loop_pre_header
    _
  $region3: #{tpu_custom_call.1} parent=0 // loop_header
    %s11 = sphi 0, %s15
    %p12 = scmp.ge.s32.totalorder %s11, 4
    %s18 = sphi 0, %s30
    %s19 = sphi 0, %s26
    %s20 = sphi 0, %s18
    %s21 = sphi 0, %s19
    %s22 = sphi 0, %s20
    %s23 = sphi 0, %s21
    %s33 = sphi 0, %s35
    %s36 = sphi 0, %s33
    %s37 = sphi 0, %s36
    %s53 = sphi 0, %s37
    %s57 = sphi 0, %s57
    %s59 = sphi 0, %s57
    %s60 = sphi 0, %s59
    %s74 = sphi 0, %s60
    %s78 = sphi 0, %s78
    %s80 = sphi 0, %s78
    %s81 = sphi 0, %s80
    %s95 = sphi 0, %s81
    %s99 = sphi 0, %s99
    %s101 = sphi 0, %s99
    %s102 = sphi 0, %s101
    %s116 = sphi 0, %s102
    %s120 = sphi 0, %s120
    %s122 = sphi 0, %s120
    %s123 = sphi 0, %s122
    %s137 = sphi 0, %s123
    %s145 = sphi 0, %s147
    %s148 = sphi 0, %s145
    %s149 = sphi 0, %s148
    %s165 = sphi 0, %s149
  $region4: #{tpu_custom_call.1} parent=0 // loop_header_branch
    %14 = sbr.rel (%p12) target = $region8
  $region5: #{tpu_custom_call.1} parent=0 // loop_body
    %s16 = ssub.s32 %s11, 1
    %s17 = ssub.s32 %s11, 2
    %s24 = sadd.s32 1, %s19
    %p25 = scmp.ge.s32.totalorder %s24, 1
    %s26 = scalar_select %p25, 0, %s24
    %s27 = sadd.s32 1, %s18
    %s28 = scalar_select %p25, %s27, %s18
    %p29 = scmp.ge.s32.totalorder %s28, 2
    %s30 = scalar_select %p29, 0, %s28
    %s31 = ssub.s32 %s18, %s30
    %p32 = scmp.eq.s32.totalorder %s31, 0
    %s34 = sadd.s32 %s33, 1
    %s35 = scalar_select %p32, %s33, %s34
    %p38 = pneg %p32
    %p39 = scmp.eq.s32.totalorder %s11, 1
    %p40 = por %p38, %p39
    %p41 = scmp.ne.s32.totalorder %s33, %s36
    %p42 = scmp.eq.s32.totalorder %s11, 0
    %p43 = por %p41, %p42
    %p44 = scmp.ne.s32.totalorder %s33, %s36
    %p45 = scmp.eq.s32.totalorder %s16, 1
    %p46 = por %p44, %p45
    %p47 = scmp.ne.s32.totalorder %s36, %s37
    %p48 = scmp.eq.s32.totalorder %s16, 0
    %p49 = por %p47, %p48
    %p50 = scmp.ne.s32.totalorder %s36, %s37
    %p51 = scmp.eq.s32.totalorder %s17, 1
    %p52 = por %p50, %p51
    %p54 = scmp.ne.s32.totalorder %s37, %s53
    %p55 = scmp.eq.s32.totalorder %s17, 0
    %p56 = por %p54, %p55
    %s58 = sadd.s32 %s57, 1
    %p61 = scmp.eq.s32.totalorder %s11, 1
    %p62 = scmp.ne.s32.totalorder %s57, %s59
    %p63 = scmp.eq.s32.totalorder %s11, 0
    %p64 = por %p62, %p63
    %p65 = scmp.ne.s32.totalorder %s57, %s59
    %p66 = scmp.eq.s32.totalorder %s16, 1
    %p67 = por %p65, %p66
    %p68 = scmp.ne.s32.totalorder %s59, %s60
    %p69 = scmp.eq.s32.totalorder %s16, 0
    %p70 = por %p68, %p69
    %p71 = scmp.ne.s32.totalorder %s59, %s60
    %p72 = scmp.eq.s32.totalorder %s17, 1
    %p73 = por %p71, %p72
    %p75 = scmp.ne.s32.totalorder %s60, %s74
    %p76 = scmp.eq.s32.totalorder %s17, 0
    %p77 = por %p75, %p76
    %s79 = sadd.s32 %s78, 1
    %p82 = scmp.eq.s32.totalorder %s11, 1
    %p83 = scmp.ne.s32.totalorder %s78, %s80
    %p84 = scmp.eq.s32.totalorder %s11, 0
    %p85 = por %p83, %p84
    %p86 = scmp.ne.s32.totalorder %s78, %s80
    %p87 = scmp.eq.s32.totalorder %s16, 1
    %p88 = por %p86, %p87
    %p89 = scmp.ne.s32.totalorder %s80, %s81
    %p90 = scmp.eq.s32.totalorder %s16, 0
    %p91 = por %p89, %p90
    %p92 = scmp.ne.s32.totalorder %s80, %s81
    %p93 = scmp.eq.s32.totalorder %s17, 1
    %p94 = por %p92, %p93
    %p96 = scmp.ne.s32.totalorder %s81, %s95
    %p97 = scmp.eq.s32.totalorder %s17, 0
    %p98 = por %p96, %p97
    %s100 = sadd.s32 %s99, 1
    %p103 = scmp.eq.s32.totalorder %s11, 1
    %p104 = scmp.ne.s32.totalorder %s99, %s101
    %p105 = scmp.eq.s32.totalorder %s11, 0
    %p106 = por %p104, %p105
    %p107 = scmp.ne.s32.totalorder %s99, %s101
    %p108 = scmp.eq.s32.totalorder %s16, 1
    %p109 = por %p107, %p108
    %p110 = scmp.ne.s32.totalorder %s101, %s102
    %p111 = scmp.eq.s32.totalorder %s16, 0
    %p112 = por %p110, %p111
    %p113 = scmp.ne.s32.totalorder %s101, %s102
    %p114 = scmp.eq.s32.totalorder %s17, 1
    %p115 = por %p113, %p114
    %p117 = scmp.ne.s32.totalorder %s102, %s116
    %p118 = scmp.eq.s32.totalorder %s17, 0
    %p119 = por %p117, %p118
    %s121 = sadd.s32 %s120, 1
    %p124 = scmp.eq.s32.totalorder %s11, 1
    %p125 = scmp.ne.s32.totalorder %s120, %s122
    %p126 = scmp.eq.s32.totalorder %s11, 0
    %p127 = por %p125, %p126
    %p128 = scmp.ne.s32.totalorder %s120, %s122
    %p129 = scmp.eq.s32.totalorder %s16, 1
    %p130 = por %p128, %p129
    %p131 = scmp.ne.s32.totalorder %s122, %s123
    %p132 = scmp.eq.s32.totalorder %s16, 0
    %p133 = por %p131, %p132
    %p134 = scmp.ne.s32.totalorder %s122, %s123
    %p135 = scmp.eq.s32.totalorder %s17, 1
    %p136 = por %p134, %p135
    %p138 = scmp.ne.s32.totalorder %s123, %s137
    %p139 = scmp.eq.s32.totalorder %s17, 0
    %p140 = por %p138, %p139
    %s141 = ssub.s32 %s18, %s30
    %s142 = ssub.s32 %s19, %s26
    %s143 = sor.u32 %s141, %s142
    %p144 = scmp.eq.s32.totalorder %s143, 0
    %s146 = sadd.s32 %s145, 1
    %s147 = scalar_select %p144, %s145, %s146
    %p150 = pneg %p144
    %p151 = scmp.eq.s32.totalorder %s11, 1
    %p152 = por %p150, %p151
    %p153 = scmp.ne.s32.totalorder %s145, %s148
    %p154 = scmp.eq.s32.totalorder %s11, 0
    %p155 = por %p153, %p154
    %p156 = scmp.ne.s32.totalorder %s145, %s148
    %p157 = scmp.eq.s32.totalorder %s16, 1
    %p158 = por %p156, %p157
    %p159 = scmp.ne.s32.totalorder %s148, %s149
    %p160 = scmp.eq.s32.totalorder %s16, 0
    %p161 = por %p159, %p160
    %p162 = scmp.ne.s32.totalorder %s148, %s149
    %p163 = scmp.eq.s32.totalorder %s17, 1
    %p164 = por %p162, %p163
    %p166 = scmp.ne.s32.totalorder %s149, %s165
    %p167 = scmp.eq.s32.totalorder %s17, 0
    %p168 = por %p166, %p167
    %p169 = scmp.le.s32.totalorder 1, %s11
    %p170 = scmp.lt.s32.totalorder %s11, 3
    %p171 = pnand %p169, %p170
    %p172 = pneg %p171
    // Predicated region
    $region9: #{tpu_custom_call.1} parent=5 // pred_check
      _
    $region10: #{tpu_custom_call.1} parent=5 // pred_check_branch
      %174 = sbr.rel (%p171) target = $region12
    $region11: #{tpu_custom_call.1} parent=5 // pred_region
      %s175 = ssub.s32 %s11, 1
      // Predicated region
      $region13: #{tpu_custom_call.1} parent=11 // pred_check
        %p176 = pneg %p49
      $region14: #{tpu_custom_call.1} parent=11 // pred_check_branch
        %178 = sbr.rel (%p176) target = $region16
      $region15: #{tpu_custom_call.1} parent=11 // pred_region
        %p179 = scmp.lt.s32.totalorder %s20, 1
        %s180 = scalar_select %p179, %s20, 1
        %s181 = smul.addr %s180, 32
        %s182 = smul.addr %s181, 8
        %s183 = scalar_lea.vmem %s0, %s182
      $region16: #{tpu_custom_call.1} parent=11 // pred_fallthru
        _
      // Predicated region
      $region17: #{tpu_custom_call.1} parent=11 // pred_check
        %p184 = pneg %p70
      $region18: #{tpu_custom_call.1} parent=11 // pred_check_branch
        %186 = sbr.rel (%p184) target = $region20
      $region19: #{tpu_custom_call.1} parent=11 // pred_region
        _
      $region20: #{tpu_custom_call.1} parent=11 // pred_fallthru
        _
      // Predicated region
      $region21: #{tpu_custom_call.1} parent=11 // pred_check
        %p187 = pneg %p91
      $region22: #{tpu_custom_call.1} parent=11 // pred_check_branch
        %189 = sbr.rel (%p187) target = $region24
      $region23: #{tpu_custom_call.1} parent=11 // pred_region
        _
      $region24: #{tpu_custom_call.1} parent=11 // pred_fallthru
        _
      // Predicated region
      $region25: #{tpu_custom_call.1} parent=11 // pred_check
        %p190 = pneg %p112
      $region26: #{tpu_custom_call.1} parent=11 // pred_check_branch
        %192 = sbr.rel (%p190) target = $region28
      $region27: #{tpu_custom_call.1} parent=11 // pred_region
        _
      $region28: #{tpu_custom_call.1} parent=11 // pred_fallthru
        _
      // Predicated region
      $region29: #{tpu_custom_call.1} parent=11 // pred_check
        %p193 = pneg %p133
      $region30: #{tpu_custom_call.1} parent=11 // pred_check_branch
        %195 = sbr.rel (%p193) target = $region32
      $region31: #{tpu_custom_call.1} parent=11 // pred_region
        _
      $region32: #{tpu_custom_call.1} parent=11 // pred_fallthru
        _
    $region12: #{tpu_custom_call.1} parent=5 // pred_fallthru
      _
    %p196 = scmp.lt.s32.totalorder %s11, 2
    // Predicated region
    $region33: #{tpu_custom_call.1} parent=5 // pred_check
      %p197 = pneg %p196
    $region34: #{tpu_custom_call.1} parent=5 // pred_check_branch
      %199 = sbr.rel (%p197) target = $region36
    $region35: #{tpu_custom_call.1} parent=5 // pred_region
      _
    $region36: #{tpu_custom_call.1} parent=5 // pred_fallthru
      _
    %p200 = scmp.le.s32.totalorder 1, %s11
    %p201 = scmp.lt.s32.totalorder %s11, 3
    %p202 = pnand %p200, %p201
    %p203 = pneg %p202
    // Predicated region
    $region37: #{tpu_custom_call.1} parent=5 // pred_check
      _
    $region38: #{tpu_custom_call.1} parent=5 // pred_check_branch
      %205 = sbr.rel (%p202) target = $region40
    $region39: #{tpu_custom_call.1} parent=5 // pred_region
      %s206 = ssub.s32 %s11, 1
      %p207 = scmp.lt.s32.totalorder %s20, 1
      %s208 = scalar_select %p207, %s20, 1
      %s209 = smul.addr %s208, 32
      %s210 = smul.addr %s209, 8
      %s211 = scalar_lea.vmem %s0, %s210
      %p212 = pneg %p49
      %p213 = pneg %p46
      %p214 = pneg %p70
      %p215 = pneg %p67
      %p216 = pneg %p91
      %p217 = pneg %p88
      %p218 = pneg %p112
      %p219 = pneg %p109
      %p220 = pneg %p133
      %p221 = pneg %p130
      %p222 = pneg %p161
      %p223 = pneg %p158
      %s224 = smul.u32 32, %s21
      %p225 = scmp.lt.s32.totalorder %s20, 1
      %s226 = scalar_select %p225, %s20, 1
      %p227 = scmp.lt.s32.totalorder %s224, 31
      %s228 = scalar_select %p227, %s224, 31
      %s229 = smul.addr %s226, 32
      %s230 = sadd.s32 %s228, %s229
      %s231 = smul.addr %s230, 8
      %s232 = scalar_lea.vmem %s5, %s231
      %p233 = scmp.lt.s32.totalorder %s20, 1
      %s234 = scalar_select %p233, %s20, 1
      %s235 = smul.addr %s234, 32
      %s236 = smul.addr %s235, 8
      %s237 = scalar_lea.vmem %s0, %s236
      %s238 = smul.u32 32, %s21
      %p239 = scmp.lt.s32.totalorder %s20, 1
      %s240 = scalar_select %p239, %s20, 1
      %p241 = scmp.lt.s32.totalorder %s238, 31
      %s242 = scalar_select %p241, %s238, 31
      %s243 = smul.addr %s240, 32
      %s244 = sadd.s32 %s242, %s243
      %s245 = smul.addr %s244, 8
      %s246 = scalar_lea.vmem %s5, %s245
      %s247 = smul.u32 32, %s21
      %p249 = scmp.eq.s32.totalorder %s21, 0
      // Predicated region
      $region41: #{tpu_custom_call.1} parent=39 // pred_check
        %p250 = pneg %p249
      $region42: #{tpu_custom_call.1} parent=39 // pred_check_branch
        %252 = sbr.rel (%p250) target = $region44
      $region43: #{tpu_custom_call.1} parent=39 // pred_region
        %v253 = vld [vmem:[%s237] sm:$0xff]
        %v254 = vld [vmem:[%s237 + $0x8] sm:$0xff]
        %v255 = vld [vmem:[%s237 + $0x10] sm:$0xff]
        %v256 = vld [vmem:[%s237 + $0x18] sm:$0xff]
        %v257 = vld [vmem:[%s237 + $0x20] sm:$0xff]
        %v258 = vld [vmem:[%s237 + $0x28] sm:$0xff]
        %v259 = vld [vmem:[%s237 + $0x30] sm:$0xff]
        %v260 = vld [vmem:[%s237 + $0x38] sm:$0xff]
        %v261 = vld [vmem:[%s237 + $0x40] sm:$0xff]
        %v262 = vld [vmem:[%s237 + $0x48] sm:$0xff]
        %v263 = vld [vmem:[%s237 + $0x50] sm:$0xff]
        %v264 = vld [vmem:[%s237 + $0x58] sm:$0xff]
        %v265 = vld [vmem:[%s237 + $0x60] sm:$0xff]
        %v266 = vld [vmem:[%s237 + $0x68] sm:$0xff]
        %v267 = vld [vmem:[%s237 + $0x70] sm:$0xff]
        %v268 = vld [vmem:[%s237 + $0x78] sm:$0xff]
        %v269 = vld [vmem:[%s237 + $0x80] sm:$0xff]
        %v270 = vld [vmem:[%s237 + $0x88] sm:$0xff]
        %v271 = vld [vmem:[%s237 + $0x90] sm:$0xff]
        %v272 = vld [vmem:[%s237 + $0x98] sm:$0xff]
        %v273 = vld [vmem:[%s237 + $0xa0] sm:$0xff]
        %v274 = vld [vmem:[%s237 + $0xa8] sm:$0xff]
        %v275 = vld [vmem:[%s237 + $0xb0] sm:$0xff]
        %v276 = vld [vmem:[%s237 + $0xb8] sm:$0xff]
        %v277 = vld [vmem:[%s237 + $0xc0] sm:$0xff]
        %v278 = vld [vmem:[%s237 + $0xc8] sm:$0xff]
        %v279 = vld [vmem:[%s237 + $0xd0] sm:$0xff]
        %v280 = vld [vmem:[%s237 + $0xd8] sm:$0xff]
        %v281 = vld [vmem:[%s237 + $0xe0] sm:$0xff]
        %v282 = vld [vmem:[%s237 + $0xe8] sm:$0xff]
        %v283 = vld [vmem:[%s237 + $0xf0] sm:$0xff]
        %v284 = vld [vmem:[%s237 + $0xf8] sm:$0xff]
        %v285 = vmax.f32 %v253, %v261
        %v286 = vmax.f32 %v254, %v262
        %v287 = vmax.f32 %v255, %v263
        %v288 = vmax.f32 %v256, %v264
        %v289 = vmax.f32 %v257, %v265
        %v290 = vmax.f32 %v258, %v266
        %v291 = vmax.f32 %v259, %v267
        %v292 = vmax.f32 %v260, %v268
        %v293 = vmax.f32 %v269, %v277
        %v294 = vmax.f32 %v270, %v278
        %v295 = vmax.f32 %v271, %v279
        %v296 = vmax.f32 %v272, %v280
        %v297 = vmax.f32 %v273, %v281
        %v298 = vmax.f32 %v274, %v282
        %v299 = vmax.f32 %v275, %v283
        %v300 = vmax.f32 %v276, %v284
        %v301 = vmax.f32 %v285, %v293
        %v302 = vmax.f32 %v286, %v294
        %v303 = vmax.f32 %v287, %v295
        %v304 = vmax.f32 %v288, %v296
        %v305 = vmax.f32 %v289, %v297
        %v306 = vmax.f32 %v290, %v298
        %v307 = vmax.f32 %v291, %v299
        %v308 = vmax.f32 %v292, %v300
        %v309 = vpack.c.bf16 %v302, %v301
        %v310 = vpack.c.bf16 %v304, %v303
        %v311 = vpack.c.bf16 %v306, %v305
        %v312 = vpack.c.bf16 %v308, %v307
        %vm313 = vcmask 31744
        %314 = vst.msk [vmem:[#allocation2] sm:$0xff] %vm313, %v309
        %315 = vst.msk [vmem:[#allocation2 + $0x8] sm:$0xff] %vm313, %v310
        %316 = vst.msk [vmem:[#allocation2 + $0x10] sm:$0xff] %vm313, %v311
        %317 = vst.msk [vmem:[#allocation2 + $0x18] sm:$0xff] %vm313, %v312
        %v318 = vpack.c.bf16 %v254, %v253
        %v319 = vpack.c.bf16 %v256, %v255
        %v320 = vpack.c.bf16 %v258, %v257
        %v321 = vpack.c.bf16 %v260, %v259
        %v322 = vpack.c.bf16 %v262, %v261
        %v323 = vpack.c.bf16 %v264, %v263
        %v324 = vpack.c.bf16 %v266, %v265
        %v325 = vpack.c.bf16 %v268, %v267
        %v326 = vpack.c.bf16 %v270, %v269
        %v327 = vpack.c.bf16 %v272, %v271
        %v328 = vpack.c.bf16 %v274, %v273
        %v329 = vpack.c.bf16 %v276, %v275
        %v330 = vpack.c.bf16 %v278, %v277
        %v331 = vpack.c.bf16 %v280, %v279
        %v332 = vpack.c.bf16 %v282, %v281
        %v333 = vpack.c.bf16 %v284, %v283
        %v334 = vld [vmem:[%s1] sm:$0x3]
        %v336 = vsel %vm313, %v318, 0
        %v339 = vsel %vm313, %v319, 0
        %v342 = vsel %vm313, %v320, 0
        %v345 = vsel %vm313, %v321, 0
        %v348 = vsel %vm313, %v322, 0
        %v351 = vsel %vm313, %v323, 0
        %v354 = vsel %vm313, %v324, 0
        %v357 = vsel %vm313, %v325, 0
        %v360 = vsel %vm313, %v326, 0
        %v363 = vsel %vm313, %v327, 0
        %v366 = vsel %vm313, %v328, 0
        %v369 = vsel %vm313, %v329, 0
        %v372 = vsel %vm313, %v330, 0
        %v375 = vsel %vm313, %v331, 0
        %v378 = vsel %vm313, %v332, 0
        %v381 = vsel %vm313, %v333, 0
        %vm383 = vcmask 1041408
        %v385 = vsel %vm383, %v334, 0
        %387 = vmatprep.subr.bf16.mxu0 0
        %388 = vmatpush1.bf16.msra.mxu0 %v385
        %389 = vmatprep.subr.bf16.mxu0 0
        %390 = vmatpush1.bf16.msra.mxu0 0
        %391 = vmatprep.subr.bf16.mxu0 0
        %392 = vmatpush1.bf16.msra.mxu0 0
        %393 = vmatprep.subr.bf16.mxu0 0
        %394 = vmatpush1.bf16.msra.mxu0 0
        %395 = vmatprep.subr.bf16.mxu0 0
        %396 = vmatpush1.bf16.msra.mxu0 0
        %397 = vmatprep.subr.bf16.mxu0 0
        %398 = vmatpush1.bf16.msra.mxu0 0
        %399 = vmatprep.subr.bf16.mxu0 0
        %400 = vmatpush1.bf16.msra.mxu0 0
        %401 = vmatprep.subr.bf16.mxu0 0
        %402 = vmatpush1.bf16.msra.mxu0 0
        %403 = vmatprep.subr.bf16.mxu0 0
        %404 = vmatpush1.bf16.msra.mxu0 0
        %405 = vmatprep.subr.bf16.mxu0 0
        %406 = vmatpush1.bf16.msra.mxu0 0
        %407 = vmatprep.subr.bf16.mxu0 0
        %408 = vmatpush1.bf16.msra.mxu0 0
        %409 = vmatprep.subr.bf16.mxu0 0
        %410 = vmatpush1.bf16.msra.mxu0 0
        %411 = vmatprep.subr.bf16.mxu0 0
        %412 = vmatpush1.bf16.msra.mxu0 0
        %413 = vmatprep.subr.bf16.mxu0 0
        %414 = vmatpush1.bf16.msra.mxu0 0
        %415 = vmatprep.subr.bf16.mxu0 0
        %416 = vmatpush1.bf16.msra.mxu0 0
        %417 = vmatprep.subr.bf16.mxu0 0
        %418 = vmatpush1.bf16.msra.mxu0 0
        %419 = vmatprep.mubr.bf16.mxu0 0
        %420 = vmatmul.mubr.bf16.gmra.mrb[0].mxu0 %v336
        %v421 = vpop.f32.mrb[0].mxu0
        %v422 = vadd.f32 0.0, %v421
        %v423 = vpop.f32.mrb[0].mxu0
        %v424 = vpop.f32.mrb[0].mxu0
        %v425 = vadd.f32 0.0, %v424
        %v426 = vpop.f32.mrb[0].mxu0
        %427 = vmatprep.mubr.bf16.mxu0 0
        %428 = vmatmul.mubr.bf16.gmra.mrb[0].mxu0 %v339
        %v429 = vpop.f32.mrb[0].mxu0
        %v430 = vadd.f32 0.0, %v429
        %v431 = vpop.f32.mrb[0].mxu0
        %v432 = vpop.f32.mrb[0].mxu0
        %v433 = vadd.f32 0.0, %v432
        %v434 = vpop.f32.mrb[0].mxu0
        %435 = vmatprep.mubr.bf16.mxu0 0
        %436 = vmatmul.mubr.bf16.gmra.mrb[0].mxu0 %v342
        %v437 = vpop.f32.mrb[0].mxu0
        %v438 = vadd.f32 0.0, %v437
        %v439 = vpop.f32.mrb[0].mxu0
        %v440 = vpop.f32.mrb[0].mxu0
        %v441 = vadd.f32 0.0, %v440
        %v442 = vpop.f32.mrb[0].mxu0
        %443 = vmatprep.mubr.bf16.mxu0 0
        %444 = vmatmul.mubr.bf16.gmra.mrb[0].mxu0 %v345
        %v445 = vpop.f32.mrb[0].mxu0
        %v446 = vadd.f32 0.0, %v445
        %v447 = vpop.f32.mrb[0].mxu0
        %v448 = vpop.f32.mrb[0].mxu0
        %v449 = vadd.f32 0.0, %v448
        %v450 = vpop.f32.mrb[0].mxu0
        %451 = vmatprep.mubr.bf16.mxu0 0
        %452 = vmatmul.mubr.bf16.gmra.mrb[0].mxu0 %v348
        %v453 = vpop.f32.mrb[0].mxu0
        %v454 = vadd.f32 0.0, %v453
        %v455 = vpop.f32.mrb[0].mxu0
        %v456 = vpop.f32.mrb[0].mxu0
        %v457 = vadd.f32 0.0, %v456
        %v458 = vpop.f32.mrb[0].mxu0
        %459 = vmatprep.mubr.bf16.mxu0 0
        %460 = vmatmul.mubr.bf16.gmra.mrb[0].mxu0 %v351
        %v461 = vpop.f32.mrb[0].mxu0
        %v462 = vadd.f32 0.0, %v461
        %v463 = vpop.f32.mrb[0].mxu0
        %v464 = vpop.f32.mrb[0].mxu0
        %v465 = vadd.f32 0.0, %v464
        %v466 = vpop.f32.mrb[0].mxu0
        %467 = vmatprep.mubr.bf16.mxu0 0
        %468 = vmatmul.mubr.bf16.gmra.mrb[0].mxu0 %v354
        %v469 = vpop.f32.mrb[0].mxu0
        %v470 = vadd.f32 0.0, %v469
        %v471 = vpop.f32.mrb[0].mxu0
        %v472 = vpop.f32.mrb[0].mxu0
        %v473 = vadd.f32 0.0, %v472
        %v474 = vpop.f32.mrb[0].mxu0
        %475 = vmatprep.mubr.bf16.mxu0 0
        %476 = vmatmul.mubr.bf16.gmra.mrb[0].mxu0 %v357
        %v477 = vpop.f32.mrb[0].mxu0
        %v478 = vadd.f32 0.0, %v477
        %v479 = vpop.f32.mrb[0].mxu0
        %v480 = vpop.f32.mrb[0].mxu0
        %v481 = vadd.f32 0.0, %v480
        %v482 = vpop.f32.mrb[0].mxu0
        %483 = vmatprep.mubr.bf16.mxu0 0
        %484 = vmatmul.mubr.bf16.gmra.mrb[0].mxu0 %v360
        %v485 = vpop.f32.mrb[0].mxu0
        %v486 = vadd.f32 0.0, %v485
        %v487 = vpop.f32.mrb[0].mxu0
        %v488 = vpop.f32.mrb[0].mxu0
        %v489 = vadd.f32 0.0, %v488
        %v490 = vpop.f32.mrb[0].mxu0
        %491 = vmatprep.mubr.bf16.mxu0 0
        %492 = vmatmul.mubr.bf16.gmra.mrb[0].mxu0 %v363
        %v493 = vpop.f32.mrb[0].mxu0
        %v494 = vadd.f32 0.0, %v493
        %v495 = vpop.f32.mrb[0].mxu0
        %v496 = vpop.f32.mrb[0].mxu0
        %v497 = vadd.f32 0.0, %v496
        %v498 = vpop.f32.mrb[0].mxu0
        %499 = vmatprep.mubr.bf16.mxu0 0
        %500 = vmatmul.mubr.bf16.gmra.mrb[0].mxu0 %v366
        %v501 = vpop.f32.mrb[0].mxu0
        %v502 = vadd.f32 0.0, %v501
        %v503 = vpop.f32.mrb[0].mxu0
        %v504 = vpop.f32.mrb[0].mxu0
        %v505 = vadd.f32 0.0, %v504
        %v506 = vpop.f32.mrb[0].mxu0
        %507 = vmatprep.mubr.bf16.mxu0 0
        %508 = vmatmul.mubr.bf16.gmra.mrb[0].mxu0 %v369
        %v509 = vpop.f32.mrb[0].mxu0
        %v510 = vadd.f32 0.0, %v509
        %v511 = vpop.f32.mrb[0].mxu0
        %v512 = vpop.f32.mrb[0].mxu0
        %v513 = vadd.f32 0.0, %v512
        %v514 = vpop.f32.mrb[0].mxu0
        %515 = vmatprep.mubr.bf16.mxu0 0
        %516 = vmatmul.mubr.bf16.gmra.mrb[0].mxu0 %v372
        %v517 = vpop.f32.mrb[0].mxu0
        %v518 = vadd.f32 0.0, %v517
        %v519 = vpop.f32.mrb[0].mxu0
        %v520 = vpop.f32.mrb[0].mxu0
        %v521 = vadd.f32 0.0, %v520
        %v522 = vpop.f32.mrb[0].mxu0
        %523 = vmatprep.mubr.bf16.mxu0 0
        %524 = vmatmul.mubr.bf16.gmra.mrb[0].mxu0 %v375
        %v525 = vpop.f32.mrb[0].mxu0
        %v526 = vadd.f32 0.0, %v525
        %v527 = vpop.f32.mrb[0].mxu0
        %v528 = vpop.f32.mrb[0].mxu0
        %v529 = vadd.f32 0.0, %v528
        %v530 = vpop.f32.mrb[0].mxu0
        %531 = vmatprep.mubr.bf16.mxu0 0
        %532 = vmatmul.mubr.bf16.gmra.mrb[0].mxu0 %v378
        %v533 = vpop.f32.mrb[0].mxu0
        %v534 = vadd.f32 0.0, %v533
        %v535 = vpop.f32.mrb[0].mxu0
        %v536 = vpop.f32.mrb[0].mxu0
        %v537 = vadd.f32 0.0, %v536
        %v538 = vpop.f32.mrb[0].mxu0
        %539 = vmatprep.mubr.bf16.mxu0 0
        %540 = vmatmul.mubr.bf16.gmra.mrb[0].mxu0 %v381
        %v541 = vpop.f32.mrb[0].mxu0
        %v542 = vadd.f32 0.0, %v541
        %v543 = vpop.f32.mrb[0].mxu0
        %v544 = vpop.f32.mrb[0].mxu0
        %v545 = vadd.f32 0.0, %v544
        %v546 = vpop.f32.mrb[0].mxu0
        %547 = vdwg.mxu0
        %v548 = vmax.f32 %v422, %v454
        %v549 = vmax.f32 %v425, %v457
        %v550 = vmax.f32 %v430, %v462
        %v551 = vmax.f32 %v433, %v465
        %v552 = vmax.f32 %v438, %v470
        %v553 = vmax.f32 %v441, %v473
        %v554 = vmax.f32 %v446, %v478
        %v555 = vmax.f32 %v449, %v481
        %v556 = vmax.f32 %v486, %v518
        %v557 = vmax.f32 %v489, %v521
        %v558 = vmax.f32 %v494, %v526
        %v559 = vmax.f32 %v497, %v529
        %v560 = vmax.f32 %v502, %v534
        %v561 = vmax.f32 %v505, %v537
        %v562 = vmax.f32 %v510, %v542
        %v563 = vmax.f32 %v513, %v545
        %v564 = vmax.f32 %v548, %v556
        %v565 = vmax.f32 %v549, %v557
        %v566 = vmax.f32 %v550, %v558
        %v567 = vmax.f32 %v551, %v559
        %v568 = vmax.f32 %v552, %v560
        %v569 = vmax.f32 %v553, %v561
        %v570 = vmax.f32 %v554, %v562
        %v571 = vmax.f32 %v555, %v563
        %v572 = vld [vmem:[%s2] sm:$0x1]
        %v574 = vlaneseq
        %v575 = vshrl.u32 %v574, 7
        %v576 = vsub.s32 0, %v575
        %v577 = vrot.slane %v572, %v576
        %v579 = vadd.f32 %v564, %v577
        %v580 = vadd.f32 %v565, %v577
        %v581 = vadd.f32 %v566, %v577
        %v582 = vadd.f32 %v567, %v577
        %v583 = vadd.f32 %v568, %v577
        %v584 = vadd.f32 %v569, %v577
        %v585 = vadd.f32 %v570, %v577
        %v586 = vadd.f32 %v571, %v577
        %v587 = vpack.c.bf16 %v580, %v579
        %v588 = vpack.c.bf16 %v582, %v581
        %v589 = vpack.c.bf16 %v584, %v583
        %v590 = vpack.c.bf16 %v586, %v585
        %vm591 = vcmask 15360
        %592 = vst.msk [vmem:[#allocation3] sm:$0xff] %vm591, %v587
        %593 = vst.msk [vmem:[#allocation3 + $0x8] sm:$0xff] %vm591, %v588
        %594 = vst.msk [vmem:[#allocation3 + $0x10] sm:$0xff] %vm591, %v589
        %595 = vst.msk [vmem:[#allocation3 + $0x18] sm:$0xff] %vm591, %v590
      $region44: #{tpu_custom_call.1} parent=39 // pred_fallthru
        _
      %s596 = smul.u32 %s21, 256
      %s597 = scalar_lea.vmem %s237, %s596
      %v598 = vld [vmem:[%s597] sm:$0xff]
      %v599 = vld [vmem:[%s597 + $0x8] sm:$0xff]
      %v600 = vld [vmem:[%s597 + $0x10] sm:$0xff]
      %v601 = vld [vmem:[%s597 + $0x18] sm:$0xff]
      %v602 = vld [vmem:[%s597 + $0x20] sm:$0xff]
      %v603 = vld [vmem:[%s597 + $0x28] sm:$0xff]
      %v604 = vld [vmem:[%s597 + $0x30] sm:$0xff]
      %v605 = vld [vmem:[%s597 + $0x38] sm:$0xff]
      %v606 = vld [vmem:[%s597 + $0x40] sm:$0xff]
      %v607 = vld [vmem:[%s597 + $0x48] sm:$0xff]
      %v608 = vld [vmem:[%s597 + $0x50] sm:$0xff]
      %v609 = vld [vmem:[%s597 + $0x58] sm:$0xff]
      %v610 = vld [vmem:[%s597 + $0x60] sm:$0xff]
      %v611 = vld [vmem:[%s597 + $0x68] sm:$0xff]
      %v612 = vld [vmem:[%s597 + $0x70] sm:$0xff]
      %v613 = vld [vmem:[%s597 + $0x78] sm:$0xff]
      %v614 = vld [vmem:[%s597 + $0x80] sm:$0xff]
      %v615 = vld [vmem:[%s597 + $0x88] sm:$0xff]
      %v616 = vld [vmem:[%s597 + $0x90] sm:$0xff]
      %v617 = vld [vmem:[%s597 + $0x98] sm:$0xff]
      %v618 = vld [vmem:[%s597 + $0xa0] sm:$0xff]
      %v619 = vld [vmem:[%s597 + $0xa8] sm:$0xff]
      %v620 = vld [vmem:[%s597 + $0xb0] sm:$0xff]
      %v621 = vld [vmem:[%s597 + $0xb8] sm:$0xff]
      %v622 = vld [vmem:[%s597 + $0xc0] sm:$0xff]
      %v623 = vld [vmem:[%s597 + $0xc8] sm:$0xff]
      %v624 = vld [vmem:[%s597 + $0xd0] sm:$0xff]
      %v625 = vld [vmem:[%s597 + $0xd8] sm:$0xff]
      %v626 = vld [vmem:[%s597 + $0xe0] sm:$0xff]
      %v627 = vld [vmem:[%s597 + $0xe8] sm:$0xff]
      %v628 = vld [vmem:[%s597 + $0xf0] sm:$0xff]
      %v629 = vld [vmem:[%s597 + $0xf8] sm:$0xff]
      %v630 = vpack.c.bf16 %v599, %v598
      %v631 = vpack.c.bf16 %v601, %v600
      %v632 = vpack.c.bf16 %v603, %v602
      %v633 = vpack.c.bf16 %v605, %v604
      %v634 = vpack.c.bf16 %v607, %v606
      %v635 = vpack.c.bf16 %v609, %v608
      %v636 = vpack.c.bf16 %v611, %v610
      %v637 = vpack.c.bf16 %v613, %v612
      %v638 = vpack.c.bf16 %v615, %v614
      %v639 = vpack.c.bf16 %v617, %v616
      %v640 = vpack.c.bf16 %v619, %v618
      %v641 = vpack.c.bf16 %v621, %v620
      %v642 = vpack.c.bf16 %v623, %v622
      %v643 = vpack.c.bf16 %v625, %v624
      %v644 = vpack.c.bf16 %v627, %v626
      %v645 = vpack.c.bf16 %v629, %v628
      %v646 = vld [vmem:[#allocation2] sm:$0xff]
      %v647 = vld [vmem:[#allocation2 + $0x8] sm:$0xff]
      %v648 = vld [vmem:[#allocation2 + $0x10] sm:$0xff]
      %v649 = vld [vmem:[#allocation2 + $0x18] sm:$0xff]
      %vm650 = vcmask 31744
      %v652 = vsel %vm650, %v630, 0
      %v655 = vsel %vm650, %v631, 0
      %v658 = vsel %vm650, %v632, 0
      %v661 = vsel %vm650, %v633, 0
      %v664 = vsel %vm650, %v634, 0
      %v667 = vsel %vm650, %v635, 0
      %v670 = vsel %vm650, %v636, 0
      %v673 = vsel %vm650, %v637, 0
      %v676 = vsel %vm650, %v638, 0
      %v679 = vsel %vm650, %v639, 0
      %v682 = vsel %vm650, %v640, 0
      %v685 = vsel %vm650, %v641, 0
      %v688 = vsel %vm650, %v642, 0
      %v691 = vsel %vm650, %v643, 0
      %v694 = vsel %vm650, %v644, 0
      %v697 = vsel %vm650, %v645, 0
      %v700 = vsel %vm650, %v646, 0
      %v703 = vsel %vm650, %v647, 0
      %v706 = vsel %vm650, %v648, 0
      %v709 = vsel %vm650, %v649, 0
      %711 = vmatprep.subr.bf16.mxu0 0
      %712 = vmatpush1.bf16.xpose.msra.mxu0 %v700
      %713 = vmatprep.subr.bf16.mxu0 0
      %714 = vmatpush1.bf16.xpose.msra.mxu0 %v703
      %715 = vmatprep.subr.bf16.mxu0 0
      %716 = vmatpush1.bf16.xpose.msra.mxu0 %v706
      %717 = vmatprep.subr.bf16.mxu0 0
      %718 = vmatpush1.bf16.xpose.msra.mxu0 %v709
      %719 = vmatprep.subr.bf16.mxu0 0
      %720 = vmatpush1.bf16.xpose.msra.mxu0 0
      %721 = vmatprep.subr.bf16.mxu0 0
      %722 = vmatpush1.bf16.xpose.msra.mxu0 0
      %723 = vmatprep.subr.bf16.mxu0 0
      %724 = vmatpush1.bf16.xpose.msra.mxu0 0
      %725 = vmatprep.subr.bf16.mxu0 0
      %726 = vmatpush1.bf16.xpose.msra.mxu0 0
      %727 = vmatprep.subr.bf16.mxu0 0
      %728 = vmatpush1.bf16.xpose.msra.mxu0 0
      %729 = vmatprep.subr.bf16.mxu0 0
      %730 = vmatpush1.bf16.xpose.msra.mxu0 0
      %731 = vmatprep.subr.bf16.mxu0 0
      %732 = vmatpush1.bf16.xpose.msra.mxu0 0
      %733 = vmatprep.subr.bf16.mxu0 0
      %734 = vmatpush1.bf16.xpose.msra.mxu0 0
      %735 = vmatprep.subr.bf16.mxu0 0
      %736 = vmatpush1.bf16.xpose.msra.mxu0 0
      %737 = vmatprep.subr.bf16.mxu0 0
      %738 = vmatpush1.bf16.xpose.msra.mxu0 0
      %739 = vmatprep.subr.bf16.mxu0 0
      %740 = vmatpush1.bf16.xpose.msra.mxu0 0
      %741 = vmatprep.subr.bf16.mxu0 0
      %742 = vmatpush1.bf16.xpose.msra.mxu0 0
      %743 = vmatprep.mubr.bf16.mxu0 0
      %744 = vmatmul.mubr.bf16.gmra.mrb[0].mxu0 %v652
      %v745 = vpop.f32.mrb[0].mxu0
      %v746 = vadd.f32 0.0, %v745
      %v747 = vpop.f32.mrb[0].mxu0
      %v748 = vpop.f32.mrb[0].mxu0
      %v749 = vadd.f32 0.0, %v748
      %v750 = vpop.f32.mrb[0].mxu0
      %751 = vmatprep.mubr.bf16.mxu0 0
      %752 = vmatmul.mubr.bf16.gmra.mrb[0].mxu0 %v655
      %v753 = vpop.f32.mrb[0].mxu0
      %v754 = vadd.f32 0.0, %v753
      %v755 = vpop.f32.mrb[0].mxu0
      %v756 = vpop.f32.mrb[0].mxu0
      %v757 = vadd.f32 0.0, %v756
      %v758 = vpop.f32.mrb[0].mxu0
      %759 = vmatprep.mubr.bf16.mxu0 0
      %760 = vmatmul.mubr.bf16.gmra.mrb[0].mxu0 %v658
      %v761 = vpop.f32.mrb[0].mxu0
      %v762 = vadd.f32 0.0, %v761
      %v763 = vpop.f32.mrb[0].mxu0
      %v764 = vpop.f32.mrb[0].mxu0
      %v765 = vadd.f32 0.0, %v764
      %v766 = vpop.f32.mrb[0].mxu0
      %767 = vmatprep.mubr.bf16.mxu0 0
      %768 = vmatmul.mubr.bf16.gmra.mrb[0].mxu0 %v661
      %v769 = vpop.f32.mrb[0].mxu0
      %v770 = vadd.f32 0.0, %v769
      %v771 = vpop.f32.mrb[0].mxu0
      %v772 = vpop.f32.mrb[0].mxu0
      %v773 = vadd.f32 0.0, %v772
      %v774 = vpop.f32.mrb[0].mxu0
      %775 = vmatprep.mubr.bf16.mxu0 0
      %776 = vmatmul.mubr.bf16.gmra.mrb[0].mxu0 %v664
      %v777 = vpop.f32.mrb[0].mxu0
      %v778 = vadd.f32 0.0, %v777
      %v779 = vpop.f32.mrb[0].mxu0
      %v780 = vpop.f32.mrb[0].mxu0
      %v781 = vadd.f32 0.0, %v780
      %v782 = vpop.f32.mrb[0].mxu0
      %783 = vmatprep.mubr.bf16.mxu0 0
      %784 = vmatmul.mubr.bf16.gmra.mrb[0].mxu0 %v667
      %v785 = vpop.f32.mrb[0].mxu0
      %v786 = vadd.f32 0.0, %v785
      %v787 = vpop.f32.mrb[0].mxu0
      %v788 = vpop.f32.mrb[0].mxu0
      %v789 = vadd.f32 0.0, %v788
      %v790 = vpop.f32.mrb[0].mxu0
      %791 = vmatprep.mubr.bf16.mxu0 0
      %792 = vmatmul.mubr.bf16.gmra.mrb[0].mxu0 %v670
      %v793 = vpop.f32.mrb[0].mxu0
      %v794 = vadd.f32 0.0, %v793
      %v795 = vpop.f32.mrb[0].mxu0
      %v796 = vpop.f32.mrb[0].mxu0
      %v797 = vadd.f32 0.0, %v796
      %v798 = vpop.f32.mrb[0].mxu0
      %799 = vmatprep.mubr.bf16.mxu0 0
      %800 = vmatmul.mubr.bf16.gmra.mrb[0].mxu0 %v673
      %v801 = vpop.f32.mrb[0].mxu0
      %v802 = vadd.f32 0.0, %v801
      %v803 = vpop.f32.mrb[0].mxu0
      %v804 = vpop.f32.mrb[0].mxu0
      %v805 = vadd.f32 0.0, %v804
      %v806 = vpop.f32.mrb[0].mxu0
      %807 = vmatprep.mubr.bf16.mxu0 0
      %808 = vmatmul.mubr.bf16.gmra.mrb[0].mxu0 %v676
      %v809 = vpop.f32.mrb[0].mxu0
      %v810 = vadd.f32 0.0, %v809
      %v811 = vpop.f32.mrb[0].mxu0
      %v812 = vpop.f32.mrb[0].mxu0
      %v813 = vadd.f32 0.0, %v812
      %v814 = vpop.f32.mrb[0].mxu0
      %815 = vmatprep.mubr.bf16.mxu0 0
      %816 = vmatmul.mubr.bf16.gmra.mrb[0].mxu0 %v679
      %v817 = vpop.f32.mrb[0].mxu0
      %v818 = vadd.f32 0.0, %v817
      %v819 = vpop.f32.mrb[0].mxu0
      %v820 = vpop.f32.mrb[0].mxu0
      %v821 = vadd.f32 0.0, %v820
      %v822 = vpop.f32.mrb[0].mxu0
      %823 = vmatprep.mubr.bf16.mxu0 0
      %824 = vmatmul.mubr.bf16.gmra.mrb[0].mxu0 %v682
      %v825 = vpop.f32.mrb[0].mxu0
      %v826 = vadd.f32 0.0, %v825
      %v827 = vpop.f32.mrb[0].mxu0
      %v828 = vpop.f32.mrb[0].mxu0
      %v829 = vadd.f32 0.0, %v828
      %v830 = vpop.f32.mrb[0].mxu0
      %831 = vmatprep.mubr.bf16.mxu0 0
      %832 = vmatmul.mubr.bf16.gmra.mrb[0].mxu0 %v685
      %v833 = vpop.f32.mrb[0].mxu0
      %v834 = vadd.f32 0.0, %v833
      %v835 = vpop.f32.mrb[0].mxu0
      %v836 = vpop.f32.mrb[0].mxu0
      %v837 = vadd.f32 0.0, %v836
      %v838 = vpop.f32.mrb[0].mxu0
      %839 = vmatprep.mubr.bf16.mxu0 0
      %840 = vmatmul.mubr.bf16.gmra.mrb[0].mxu0 %v688
      %v841 = vpop.f32.mrb[0].mxu0
      %v842 = vadd.f32 0.0, %v841
      %v843 = vpop.f32.mrb[0].mxu0
      %v844 = vpop.f32.mrb[0].mxu0
      %v845 = vadd.f32 0.0, %v844
      %v846 = vpop.f32.mrb[0].mxu0
      %847 = vmatprep.mubr.bf16.mxu0 0
      %848 = vmatmul.mubr.bf16.gmra.mrb[0].mxu0 %v691
      %v849 = vpop.f32.mrb[0].mxu0
      %v850 = vadd.f32 0.0, %v849
      %v851 = vpop.f32.mrb[0].mxu0
      %v852 = vpop.f32.mrb[0].mxu0
      %v853 = vadd.f32 0.0, %v852
      %v854 = vpop.f32.mrb[0].mxu0
      %855 = vmatprep.mubr.bf16.mxu0 0
      %856 = vmatmul.mubr.bf16.gmra.mrb[0].mxu0 %v694
      %v857 = vpop.f32.mrb[0].mxu0
      %v858 = vadd.f32 0.0, %v857
      %v859 = vpop.f32.mrb[0].mxu0
      %v860 = vpop.f32.mrb[0].mxu0
      %v861 = vadd.f32 0.0, %v860
      %v862 = vpop.f32.mrb[0].mxu0
      %863 = vmatprep.mubr.bf16.mxu0 0
      %864 = vmatmul.mubr.bf16.gmra.mrb[0].mxu0 %v697
      %v865 = vpop.f32.mrb[0].mxu0
      %v866 = vadd.f32 0.0, %v865
      %v867 = vpop.f32.mrb[0].mxu0
      %v868 = vpop.f32.mrb[0].mxu0
      %v869 = vadd.f32 0.0, %v868
      %v870 = vpop.f32.mrb[0].mxu0
      %871 = vdwg.mxu0
      %vm872 = vcmask 523264
      %v873 = vsel %vm872, %v746, -inf
      %874 = vmax.xlane.f32.xlu0 %v873
      %v875 = vpop.xlane.xlu0 %874
      %v876 = vsel %vm872, %v749, -inf
      %877 = vmax.xlane.f32.xlu0 %v876
      %v878 = vpop.xlane.xlu0 %877
      %v879 = vsel %vm872, %v754, -inf
      %880 = vmax.xlane.f32.xlu0 %v879
      %v881 = vpop.xlane.xlu0 %880
      %v882 = vsel %vm872, %v757, -inf
      %883 = vmax.xlane.f32.xlu0 %v882
      %v884 = vpop.xlane.xlu0 %883
      %v885 = vsel %vm872, %v762, -inf
      %886 = vmax.xlane.f32.xlu0 %v885
      %v887 = vpop.xlane.xlu0 %886
      %v888 = vsel %vm872, %v765, -inf
      %889 = vmax.xlane.f32.xlu0 %v888
      %v890 = vpop.xlane.xlu0 %889
      %v891 = vsel %vm872, %v770, -inf
      %892 = vmax.xlane.f32.xlu0 %v891
      %v893 = vpop.xlane.xlu0 %892
      %v894 = vsel %vm872, %v773, -inf
      %895 = vmax.xlane.f32.xlu0 %v894
      %v896 = vpop.xlane.xlu0 %895
      %v897 = vsel %vm872, %v778, -inf
      %898 = vmax.xlane.f32.xlu0 %v897
      %v899 = vpop.xlane.xlu0 %898
      %v900 = vsel %vm872, %v781, -inf
      %901 = vmax.xlane.f32.xlu0 %v900
      %v902 = vpop.xlane.xlu0 %901
      %v903 = vsel %vm872, %v786, -inf
      %904 = vmax.xlane.f32.xlu0 %v903
      %v905 = vpop.xlane.xlu0 %904
      %v906 = vsel %vm872, %v789, -inf
      %907 = vmax.xlane.f32.xlu0 %v906
      %v908 = vpop.xlane.xlu0 %907
      %v909 = vsel %vm872, %v794, -inf
      %910 = vmax.xlane.f32.xlu0 %v909
      %v911 = vpop.xlane.xlu0 %910
      %v912 = vsel %vm872, %v797, -inf
      %913 = vmax.xlane.f32.xlu0 %v912
      %v914 = vpop.xlane.xlu0 %913
      %v915 = vsel %vm872, %v802, -inf
      %916 = vmax.xlane.f32.xlu0 %v915
      %v917 = vpop.xlane.xlu0 %916
      %v918 = vsel %vm872, %v805, -inf
      %919 = vmax.xlane.f32.xlu0 %v918
      %v920 = vpop.xlane.xlu0 %919
      %v921 = vsel %vm872, %v810, -inf
      %922 = vmax.xlane.f32.xlu0 %v921
      %v923 = vpop.xlane.xlu0 %922
      %v924 = vsel %vm872, %v813, -inf
      %925 = vmax.xlane.f32.xlu0 %v924
      %v926 = vpop.xlane.xlu0 %925
      %v927 = vsel %vm872, %v818, -inf
      %928 = vmax.xlane.f32.xlu0 %v927
      %v929 = vpop.xlane.xlu0 %928
      %v930 = vsel %vm872, %v821, -inf
      %931 = vmax.xlane.f32.xlu0 %v930
      %v932 = vpop.xlane.xlu0 %931
      %v933 = vsel %vm872, %v826, -inf
      %934 = vmax.xlane.f32.xlu0 %v933
      %v935 = vpop.xlane.xlu0 %934
      %v936 = vsel %vm872, %v829, -inf
      %937 = vmax.xlane.f32.xlu0 %v936
      %v938 = vpop.xlane.xlu0 %937
      %v939 = vsel %vm872, %v834, -inf
      %940 = vmax.xlane.f32.xlu0 %v939
      %v941 = vpop.xlane.xlu0 %940
      %v942 = vsel %vm872, %v837, -inf
      %943 = vmax.xlane.f32.xlu0 %v942
      %v944 = vpop.xlane.xlu0 %943
      %v945 = vsel %vm872, %v842, -inf
      %946 = vmax.xlane.f32.xlu0 %v945
      %v947 = vpop.xlane.xlu0 %946
      %v948 = vsel %vm872, %v845, -inf
      %949 = vmax.xlane.f32.xlu0 %v948
      %v950 = vpop.xlane.xlu0 %949
      %v951 = vsel %vm872, %v850, -inf
      %952 = vmax.xlane.f32.xlu0 %v951
      %v953 = vpop.xlane.xlu0 %952
      %v954 = vsel %vm872, %v853, -inf
      %955 = vmax.xlane.f32.xlu0 %v954
      %v956 = vpop.xlane.xlu0 %955
      %v957 = vsel %vm872, %v858, -inf
      %958 = vmax.xlane.f32.xlu0 %v957
      %v959 = vpop.xlane.xlu0 %958
      %v960 = vsel %vm872, %v861, -inf
      %961 = vmax.xlane.f32.xlu0 %v960
      %v962 = vpop.xlane.xlu0 %961
      %v963 = vsel %vm872, %v866, -inf
      %964 = vmax.xlane.f32.xlu0 %v963
      %v965 = vpop.xlane.xlu0 %964
      %v966 = vsel %vm872, %v869, -inf
      %967 = vmax.xlane.f32.xlu0 %v966
      %v968 = vpop.xlane.xlu0 %967
      %v969 = vsub.f32 %v746, %v875
      %v970 = vsub.f32 %v749, %v878
      %v971 = vsub.f32 %v754, %v881
      %v972 = vsub.f32 %v757, %v884
      %v973 = vsub.f32 %v762, %v887
      %v974 = vsub.f32 %v765, %v890
      %v975 = vsub.f32 %v770, %v893
      %v976 = vsub.f32 %v773, %v896
      %v977 = vsub.f32 %v778, %v899
      %v978 = vsub.f32 %v781, %v902
      %v979 = vsub.f32 %v786, %v905
      %v980 = vsub.f32 %v789, %v908
      %v981 = vsub.f32 %v794, %v911
      %v982 = vsub.f32 %v797, %v914
      %v983 = vsub.f32 %v802, %v917
      %v984 = vsub.f32 %v805, %v920
      %v985 = vsub.f32 %v810, %v923
      %v986 = vsub.f32 %v813, %v926
      %v987 = vsub.f32 %v818, %v929
      %v988 = vsub.f32 %v821, %v932
      %v989 = vsub.f32 %v826, %v935
      %v990 = vsub.f32 %v829, %v938
      %v991 = vsub.f32 %v834, %v941
      %v992 = vsub.f32 %v837, %v944
      %v993 = vsub.f32 %v842, %v947
      %v994 = vsub.f32 %v845, %v950
      %v995 = vsub.f32 %v850, %v953
      %v996 = vsub.f32 %v853, %v956
      %v997 = vsub.f32 %v858, %v959
      %v998 = vsub.f32 %v861, %v962
      %v999 = vsub.f32 %v866, %v965
      %v1000 = vsub.f32 %v869, %v968
      %v1001 = vmul.f32 %v969, 1.442695
      %v1002 = vpow.pop %v1001
      %v1003 = vmul.f32 %v970, 1.442695
      %v1004 = vpow.pop %v1003
      %v1005 = vmul.f32 %v971, 1.442695
      %v1006 = vpow.pop %v1005
      %v1007 = vmul.f32 %v972, 1.442695
      %v1008 = vpow.pop %v1007
      %v1009 = vmul.f32 %v973, 1.442695
      %v1010 = vpow.pop %v1009
      %v1011 = vmul.f32 %v974, 1.442695
      %v1012 = vpow.pop %v1011
      %v1013 = vmul.f32 %v975, 1.442695
      %v1014 = vpow.pop %v1013
      %v1015 = vmul.f32 %v976, 1.442695
      %v1016 = vpow.pop %v1015
      %v1017 = vmul.f32 %v977, 1.442695
      %v1018 = vpow.pop %v1017
      %v1019 = vmul.f32 %v978, 1.442695
      %v1020 = vpow.pop %v1019
      %v1021 = vmul.f32 %v979, 1.442695
      %v1022 = vpow.pop %v1021
      %v1023 = vmul.f32 %v980, 1.442695
      %v1024 = vpow.pop %v1023
      %v1025 = vmul.f32 %v981, 1.442695
      %v1026 = vpow.pop %v1025
      %v1027 = vmul.f32 %v982, 1.442695
      %v1028 = vpow.pop %v1027
      %v1029 = vmul.f32 %v983, 1.442695
      %v1030 = vpow.pop %v1029
      %v1031 = vmul.f32 %v984, 1.442695
      %v1032 = vpow.pop %v1031
      %v1033 = vmul.f32 %v985, 1.442695
      %v1034 = vpow.pop %v1033
      %v1035 = vmul.f32 %v986, 1.442695
      %v1036 = vpow.pop %v1035
      %v1037 = vmul.f32 %v987, 1.442695
      %v1038 = vpow.pop %v1037
      %v1039 = vmul.f32 %v988, 1.442695
      %v1040 = vpow.pop %v1039
      %v1041 = vmul.f32 %v989, 1.442695
      %v1042 = vpow.pop %v1041
      %v1043 = vmul.f32 %v990, 1.442695
      %v1044 = vpow.pop %v1043
      %v1045 = vmul.f32 %v991, 1.442695
      %v1046 = vpow.pop %v1045
      %v1047 = vmul.f32 %v992, 1.442695
      %v1048 = vpow.pop %v1047
      %v1049 = vmul.f32 %v993, 1.442695
      %v1050 = vpow.pop %v1049
      %v1051 = vmul.f32 %v994, 1.442695
      %v1052 = vpow.pop %v1051
      %v1053 = vmul.f32 %v995, 1.442695
      %v1054 = vpow.pop %v1053
      %v1055 = vmul.f32 %v996, 1.442695
      %v1056 = vpow.pop %v1055
      %v1057 = vmul.f32 %v997, 1.442695
      %v1058 = vpow.pop %v1057
      %v1059 = vmul.f32 %v998, 1.442695
      %v1060 = vpow.pop %v1059
      %v1061 = vmul.f32 %v999, 1.442695
      %v1062 = vpow.pop %v1061
      %v1063 = vmul.f32 %v1000, 1.442695
      %v1064 = vpow.pop %v1063
      %v1065 = vsel %vm872, %v1002, 0.0
      %1066 = vadd.xlane.f32.xlu0 %v1065
      %v1067 = vpop.xlane.xlu0 %1066
      %v1068 = vsel %vm872, %v1004, 0.0
      %1069 = vadd.xlane.f32.xlu0 %v1068
      %v1070 = vpop.xlane.xlu0 %1069
      %v1071 = vsel %vm872, %v1006, 0.0
      %1072 = vadd.xlane.f32.xlu0 %v1071
      %v1073 = vpop.xlane.xlu0 %1072
      %v1074 = vsel %vm872, %v1008, 0.0
      %1075 = vadd.xlane.f32.xlu0 %v1074
      %v1076 = vpop.xlane.xlu0 %1075
      %v1077 = vsel %vm872, %v1010, 0.0
      %1078 = vadd.xlane.f32.xlu0 %v1077
      %v1079 = vpop.xlane.xlu0 %1078
      %v1080 = vsel %vm872, %v1012, 0.0
      %1081 = vadd.xlane.f32.xlu0 %v1080
      %v1082 = vpop.xlane.xlu0 %1081
      %v1083 = vsel %vm872, %v1014, 0.0
      %1084 = vadd.xlane.f32.xlu0 %v1083
      %v1085 = vpop.xlane.xlu0 %1084
      %v1086 = vsel %vm872, %v1016, 0.0
      %1087 = vadd.xlane.f32.xlu0 %v1086
      %v1088 = vpop.xlane.xlu0 %1087
      %v1089 = vsel %vm872, %v1018, 0.0
      %1090 = vadd.xlane.f32.xlu0 %v1089
      %v1091 = vpop.xlane.xlu0 %1090
      %v1092 = vsel %vm872, %v1020, 0.0
      %1093 = vadd.xlane.f32.xlu0 %v1092
      %v1094 = vpop.xlane.xlu0 %1093
      %v1095 = vsel %vm872, %v1022, 0.0
      %1096 = vadd.xlane.f32.xlu0 %v1095
      %v1097 = vpop.xlane.xlu0 %1096
      %v1098 = vsel %vm872, %v1024, 0.0
      %1099 = vadd.xlane.f32.xlu0 %v1098
      %v1100 = vpop.xlane.xlu0 %1099
      %v1101 = vsel %vm872, %v1026, 0.0
      %1102 = vadd.xlane.f32.xlu0 %v1101
      %v1103 = vpop.xlane.xlu0 %1102
      %v1104 = vsel %vm872, %v1028, 0.0
      %1105 = vadd.xlane.f32.xlu0 %v1104
      %v1106 = vpop.xlane.xlu0 %1105
      %v1107 = vsel %vm872, %v1030, 0.0
      %1108 = vadd.xlane.f32.xlu0 %v1107
      %v1109 = vpop.xlane.xlu0 %1108
      %v1110 = vsel %vm872, %v1032, 0.0
      %1111 = vadd.xlane.f32.xlu0 %v1110
      %v1112 = vpop.xlane.xlu0 %1111
      %v1113 = vsel %vm872, %v1034, 0.0
      %1114 = vadd.xlane.f32.xlu0 %v1113
      %v1115 = vpop.xlane.xlu0 %1114
      %v1116 = vsel %vm872, %v1036, 0.0
      %1117 = vadd.xlane.f32.xlu0 %v1116
      %v1118 = vpop.xlane.xlu0 %1117
      %v1119 = vsel %vm872, %v1038, 0.0
      %1120 = vadd.xlane.f32.xlu0 %v1119
      %v1121 = vpop.xlane.xlu0 %1120
      %v1122 = vsel %vm872, %v1040, 0.0
      %1123 = vadd.xlane.f32.xlu0 %v1122
      %v1124 = vpop.xlane.xlu0 %1123
      %v1125 = vsel %vm872, %v1042, 0.0
      %1126 = vadd.xlane.f32.xlu0 %v1125
      %v1127 = vpop.xlane.xlu0 %1126
      %v1128 = vsel %vm872, %v1044, 0.0
      %1129 = vadd.xlane.f32.xlu0 %v1128
      %v1130 = vpop.xlane.xlu0 %1129
      %v1131 = vsel %vm872, %v1046, 0.0
      %1132 = vadd.xlane.f32.xlu0 %v1131
      %v1133 = vpop.xlane.xlu0 %1132
      %v1134 = vsel %vm872, %v1048, 0.0
      %1135 = vadd.xlane.f32.xlu0 %v1134
      %v1136 = vpop.xlane.xlu0 %1135
      %v1137 = vsel %vm872, %v1050, 0.0
      %1138 = vadd.xlane.f32.xlu0 %v1137
      %v1139 = vpop.xlane.xlu0 %1138
      %v1140 = vsel %vm872, %v1052, 0.0
      %1141 = vadd.xlane.f32.xlu0 %v1140
      %v1142 = vpop.xlane.xlu0 %1141
      %v1143 = vsel %vm872, %v1054, 0.0
      %1144 = vadd.xlane.f32.xlu0 %v1143
      %v1145 = vpop.xlane.xlu0 %1144
      %v1146 = vsel %vm872, %v1056, 0.0
      %1147 = vadd.xlane.f32.xlu0 %v1146
      %v1148 = vpop.xlane.xlu0 %1147
      %v1149 = vsel %vm872, %v1058, 0.0
      %1150 = vadd.xlane.f32.xlu0 %v1149
      %v1151 = vpop.xlane.xlu0 %1150
      %v1152 = vsel %vm872, %v1060, 0.0
      %1153 = vadd.xlane.f32.xlu0 %v1152
      %v1154 = vpop.xlane.xlu0 %1153
      %v1155 = vsel %vm872, %v1062, 0.0
      %1156 = vadd.xlane.f32.xlu0 %v1155
      %v1157 = vpop.xlane.xlu0 %1156
      %v1158 = vsel %vm872, %v1064, 0.0
      %1159 = vadd.xlane.f32.xlu0 %v1158
      %v1160 = vpop.xlane.xlu0 %1159
      %v1161 = vpack.c.bf16 %v1004, %v1002
      %v1162 = vpack.c.bf16 %v1008, %v1006
      %v1163 = vpack.c.bf16 %v1012, %v1010
      %v1164 = vpack.c.bf16 %v1016, %v1014
      %v1165 = vpack.c.bf16 %v1020, %v1018
      %v1166 = vpack.c.bf16 %v1024, %v1022
      %v1167 = vpack.c.bf16 %v1028, %v1026
      %v1168 = vpack.c.bf16 %v1032, %v1030
      %v1169 = vpack.c.bf16 %v1036, %v1034
      %v1170 = vpack.c.bf16 %v1040, %v1038
      %v1171 = vpack.c.bf16 %v1044, %v1042
      %v1172 = vpack.c.bf16 %v1048, %v1046
      %v1173 = vpack.c.bf16 %v1052, %v1050
      %v1174 = vpack.c.bf16 %v1056, %v1054
      %v1175 = vpack.c.bf16 %v1060, %v1058
      %v1176 = vpack.c.bf16 %v1064, %v1062
      %v1177 = vld [vmem:[#allocation3] sm:$0xff]
      %v1178 = vld [vmem:[#allocation3 + $0x8] sm:$0xff]
      %v1179 = vld [vmem:[#allocation3 + $0x10] sm:$0xff]
      %v1180 = vld [vmem:[#allocation3 + $0x18] sm:$0xff]
      %v1182 = vsel %vm872, %v1161, 0
      %v1185 = vsel %vm872, %v1162, 0
      %v1188 = vsel %vm872, %v1163, 0
      %v1191 = vsel %vm872, %v1164, 0
      %v1194 = vsel %vm872, %v1165, 0
      %v1197 = vsel %vm872, %v1166, 0
      %v1200 = vsel %vm872, %v1167, 0
      %v1203 = vsel %vm872, %v1168, 0
      %v1206 = vsel %vm872, %v1169, 0
      %v1209 = vsel %vm872, %v1170, 0
      %v1212 = vsel %vm872, %v1171, 0
      %v1215 = vsel %vm872, %v1172, 0
      %v1218 = vsel %vm872, %v1173, 0
      %v1221 = vsel %vm872, %v1174, 0
      %v1224 = vsel %vm872, %v1175, 0
      %v1227 = vsel %vm872, %v1176, 0
      %1229 = vmatprep.subr.bf16.mxu0 0
      %1230 = vmatpush1.bf16.msra.mxu0 %v1177
      %1231 = vmatprep.subr.bf16.mxu0 0
      %1232 = vmatpush1.bf16.msra.mxu0 %v1178
      %1233 = vmatprep.subr.bf16.mxu0 0
      %1234 = vmatpush1.bf16.msra.mxu0 %v1179
      %1235 = vmatprep.subr.bf16.mxu0 0
      %1236 = vmatpush1.bf16.msra.mxu0 %v1180
      %1237 = vmatprep.subr.bf16.mxu0 0
      %1238 = vmatpush1.bf16.msra.mxu0 0
      %1239 = vmatprep.subr.bf16.mxu0 0
      %1240 = vmatpush1.bf16.msra.mxu0 0
      %1241 = vmatprep.subr.bf16.mxu0 0
      %1242 = vmatpush1.bf16.msra.mxu0 0
      %1243 = vmatprep.subr.bf16.mxu0 0
      %1244 = vmatpush1.bf16.msra.mxu0 0
      %1245 = vmatprep.subr.bf16.mxu0 0
      %1246 = vmatpush1.bf16.msra.mxu0 0
      %1247 = vmatprep.subr.bf16.mxu0 0
      %1248 = vmatpush1.bf16.msra.mxu0 0
      %1249 = vmatprep.subr.bf16.mxu0 0
      %1250 = vmatpush1.bf16.msra.mxu0 0
      %1251 = vmatprep.subr.bf16.mxu0 0
      %1252 = vmatpush1.bf16.msra.mxu0 0
      %1253 = vmatprep.subr.bf16.mxu0 0
      %1254 = vmatpush1.bf16.msra.mxu0 0
      %1255 = vmatprep.subr.bf16.mxu0 0
      %1256 = vmatpush1.bf16.msra.mxu0 0
      %1257 = vmatprep.subr.bf16.mxu0 0
      %1258 = vmatpush1.bf16.msra.mxu0 0
      %1259 = vmatprep.subr.bf16.mxu0 0
      %1260 = vmatpush1.bf16.msra.mxu0 0
      %1261 = vmatprep.mubr.bf16.mxu0 0
      %1262 = vmatmul.mubr.bf16.gmra.mrb[0].mxu0 %v1182
      %v1263 = vpop.f32.mrb[0].mxu0
      %v1264 = vadd.f32 0.0, %v1263
      %v1265 = vpop.f32.mrb[0].mxu0
      %v1266 = vpop.f32.mrb[0].mxu0
      %v1267 = vadd.f32 0.0, %v1266
      %v1268 = vpop.f32.mrb[0].mxu0
      %1269 = vmatprep.mubr.bf16.mxu0 0
      %1270 = vmatmul.mubr.bf16.gmra.mrb[0].mxu0 %v1185
      %v1271 = vpop.f32.mrb[0].mxu0
      %v1272 = vadd.f32 0.0, %v1271
      %v1273 = vpop.f32.mrb[0].mxu0
      %v1274 = vpop.f32.mrb[0].mxu0
      %v1275 = vadd.f32 0.0, %v1274
      %v1276 = vpop.f32.mrb[0].mxu0
      %1277 = vmatprep.mubr.bf16.mxu0 0
      %1278 = vmatmul.mubr.bf16.gmra.mrb[0].mxu0 %v1188
      %v1279 = vpop.f32.mrb[0].mxu0
      %v1280 = vadd.f32 0.0, %v1279
      %v1281 = vpop.f32.mrb[0].mxu0
      %v1282 = vpop.f32.mrb[0].mxu0
      %v1283 = vadd.f32 0.0, %v1282
      %v1284 = vpop.f32.mrb[0].mxu0
      %1285 = vmatprep.mubr.bf16.mxu0 0
      %1286 = vmatmul.mubr.bf16.gmra.mrb[0].mxu0 %v1191
      %v1287 = vpop.f32.mrb[0].mxu0
      %v1288 = vadd.f32 0.0, %v1287
      %v1289 = vpop.f32.mrb[0].mxu0
      %v1290 = vpop.f32.mrb[0].mxu0
      %v1291 = vadd.f32 0.0, %v1290
      %v1292 = vpop.f32.mrb[0].mxu0
      %1293 = vmatprep.mubr.bf16.mxu0 0
      %1294 = vmatmul.mubr.bf16.gmra.mrb[0].mxu0 %v1194
      %v1295 = vpop.f32.mrb[0].mxu0
      %v1296 = vadd.f32 0.0, %v1295
      %v1297 = vpop.f32.mrb[0].mxu0
      %v1298 = vpop.f32.mrb[0].mxu0
      %v1299 = vadd.f32 0.0, %v1298
      %v1300 = vpop.f32.mrb[0].mxu0
      %1301 = vmatprep.mubr.bf16.mxu0 0
      %1302 = vmatmul.mubr.bf16.gmra.mrb[0].mxu0 %v1197
      %v1303 = vpop.f32.mrb[0].mxu0
      %v1304 = vadd.f32 0.0, %v1303
      %v1305 = vpop.f32.mrb[0].mxu0
      %v1306 = vpop.f32.mrb[0].mxu0
      %v1307 = vadd.f32 0.0, %v1306
      %v1308 = vpop.f32.mrb[0].mxu0
      %1309 = vmatprep.mubr.bf16.mxu0 0
      %1310 = vmatmul.mubr.bf16.gmra.mrb[0].mxu0 %v1200
      %v1311 = vpop.f32.mrb[0].mxu0
      %v1312 = vadd.f32 0.0, %v1311
      %v1313 = vpop.f32.mrb[0].mxu0
      %v1314 = vpop.f32.mrb[0].mxu0
      %v1315 = vadd.f32 0.0, %v1314
      %v1316 = vpop.f32.mrb[0].mxu0
      %1317 = vmatprep.mubr.bf16.mxu0 0
      %1318 = vmatmul.mubr.bf16.gmra.mrb[0].mxu0 %v1203
      %v1319 = vpop.f32.mrb[0].mxu0
      %v1320 = vadd.f32 0.0, %v1319
      %v1321 = vpop.f32.mrb[0].mxu0
      %v1322 = vpop.f32.mrb[0].mxu0
      %v1323 = vadd.f32 0.0, %v1322
      %v1324 = vpop.f32.mrb[0].mxu0
      %1325 = vmatprep.mubr.bf16.mxu0 0
      %1326 = vmatmul.mubr.bf16.gmra.mrb[0].mxu0 %v1206
      %v1327 = vpop.f32.mrb[0].mxu0
      %v1328 = vadd.f32 0.0, %v1327
      %v1329 = vpop.f32.mrb[0].mxu0
      %v1330 = vpop.f32.mrb[0].mxu0
      %v1331 = vadd.f32 0.0, %v1330
      %v1332 = vpop.f32.mrb[0].mxu0
      %1333 = vmatprep.mubr.bf16.mxu0 0
      %1334 = vmatmul.mubr.bf16.gmra.mrb[0].mxu0 %v1209
      %v1335 = vpop.f32.mrb[0].mxu0
      %v1336 = vadd.f32 0.0, %v1335
      %v1337 = vpop.f32.mrb[0].mxu0
      %v1338 = vpop.f32.mrb[0].mxu0
      %v1339 = vadd.f32 0.0, %v1338
      %v1340 = vpop.f32.mrb[0].mxu0
      %1341 = vmatprep.mubr.bf16.mxu0 0
      %1342 = vmatmul.mubr.bf16.gmra.mrb[0].mxu0 %v1212
      %v1343 = vpop.f32.mrb[0].mxu0
      %v1344 = vadd.f32 0.0, %v1343
      %v1345 = vpop.f32.mrb[0].mxu0
      %v1346 = vpop.f32.mrb[0].mxu0
      %v1347 = vadd.f32 0.0, %v1346
      %v1348 = vpop.f32.mrb[0].mxu0
      %1349 = vmatprep.mubr.bf16.mxu0 0
      %1350 = vmatmul.mubr.bf16.gmra.mrb[0].mxu0 %v1215
      %v1351 = vpop.f32.mrb[0].mxu0
      %v1352 = vadd.f32 0.0, %v1351
      %v1353 = vpop.f32.mrb[0].mxu0
      %v1354 = vpop.f32.mrb[0].mxu0
      %v1355 = vadd.f32 0.0, %v1354
      %v1356 = vpop.f32.mrb[0].mxu0
      %1357 = vmatprep.mubr.bf16.mxu0 0
      %1358 = vmatmul.mubr.bf16.gmra.mrb[0].mxu0 %v1218
      %v1359 = vpop.f32.mrb[0].mxu0
      %v1360 = vadd.f32 0.0, %v1359
      %v1361 = vpop.f32.mrb[0].mxu0
      %v1362 = vpop.f32.mrb[0].mxu0
      %v1363 = vadd.f32 0.0, %v1362
      %v1364 = vpop.f32.mrb[0].mxu0
      %1365 = vmatprep.mubr.bf16.mxu0 0
      %1366 = vmatmul.mubr.bf16.gmra.mrb[0].mxu0 %v1221
      %v1367 = vpop.f32.mrb[0].mxu0
      %v1368 = vadd.f32 0.0, %v1367
      %v1369 = vpop.f32.mrb[0].mxu0
      %v1370 = vpop.f32.mrb[0].mxu0
      %v1371 = vadd.f32 0.0, %v1370
      %v1372 = vpop.f32.mrb[0].mxu0
      %1373 = vmatprep.mubr.bf16.mxu0 0
      %1374 = vmatmul.mubr.bf16.gmra.mrb[0].mxu0 %v1224
      %v1375 = vpop.f32.mrb[0].mxu0
      %v1376 = vadd.f32 0.0, %v1375
      %v1377 = vpop.f32.mrb[0].mxu0
      %v1378 = vpop.f32.mrb[0].mxu0
      %v1379 = vadd.f32 0.0, %v1378
      %v1380 = vpop.f32.mrb[0].mxu0
      %1381 = vmatprep.mubr.bf16.mxu0 0
      %1382 = vmatmul.mubr.bf16.gmra.mrb[0].mxu0 %v1227
      %v1383 = vpop.f32.mrb[0].mxu0
      %v1384 = vadd.f32 0.0, %v1383
      %v1385 = vpop.f32.mrb[0].mxu0
      %v1386 = vpop.f32.mrb[0].mxu0
      %v1387 = vadd.f32 0.0, %v1386
      %v1388 = vpop.f32.mrb[0].mxu0
      %1389 = vdwg.mxu0
      %v1390 = vrcp.pop %v1067
      %v1391 = vrcp.pop %v1070
      %v1392 = vrcp.pop %v1073
      %v1393 = vrcp.pop %v1076
      %v1394 = vrcp.pop %v1079
      %v1395 = vrcp.pop %v1082
      %v1396 = vrcp.pop %v1085
      %v1397 = vrcp.pop %v1088
      %v1398 = vrcp.pop %v1091
      %v1399 = vrcp.pop %v1094
      %v1400 = vrcp.pop %v1097
      %v1401 = vrcp.pop %v1100
      %v1402 = vrcp.pop %v1103
      %v1403 = vrcp.pop %v1106
      %v1404 = vrcp.pop %v1109
      %v1405 = vrcp.pop %v1112
      %v1406 = vrcp.pop %v1115
      %v1407 = vrcp.pop %v1118
      %v1408 = vrcp.pop %v1121
      %v1409 = vrcp.pop %v1124
      %v1410 = vrcp.pop %v1127
      %v1411 = vrcp.pop %v1130
      %v1412 = vrcp.pop %v1133
      %v1413 = vrcp.pop %v1136
      %v1414 = vrcp.pop %v1139
      %v1415 = vrcp.pop %v1142
      %v1416 = vrcp.pop %v1145
      %v1417 = vrcp.pop %v1148
      %v1418 = vrcp.pop %v1151
      %v1419 = vrcp.pop %v1154
      %v1420 = vrcp.pop %v1157
      %v1421 = vrcp.pop %v1160
      %v1422 = vmul.f32 %v1264, %v1390
      %v1423 = vmul.f32 %v1267, %v1391
      %v1424 = vmul.f32 %v1272, %v1392
      %v1425 = vmul.f32 %v1275, %v1393
      %v1426 = vmul.f32 %v1280, %v1394
      %v1427 = vmul.f32 %v1283, %v1395
      %v1428 = vmul.f32 %v1288, %v1396
      %v1429 = vmul.f32 %v1291, %v1397
      %v1430 = vmul.f32 %v1296, %v1398
      %v1431 = vmul.f32 %v1299, %v1399
      %v1432 = vmul.f32 %v1304, %v1400
      %v1433 = vmul.f32 %v1307, %v1401
      %v1434 = vmul.f32 %v1312, %v1402
      %v1435 = vmul.f32 %v1315, %v1403
      %v1436 = vmul.f32 %v1320, %v1404
      %v1437 = vmul.f32 %v1323, %v1405
      %v1438 = vmul.f32 %v1328, %v1406
      %v1439 = vmul.f32 %v1331, %v1407
      %v1440 = vmul.f32 %v1336, %v1408
      %v1441 = vmul.f32 %v1339, %v1409
      %v1442 = vmul.f32 %v1344, %v1410
      %v1443 = vmul.f32 %v1347, %v1411
      %v1444 = vmul.f32 %v1352, %v1412
      %v1445 = vmul.f32 %v1355, %v1413
      %v1446 = vmul.f32 %v1360, %v1414
      %v1447 = vmul.f32 %v1363, %v1415
      %v1448 = vmul.f32 %v1368, %v1416
      %v1449 = vmul.f32 %v1371, %v1417
      %v1450 = vmul.f32 %v1376, %v1418
      %v1451 = vmul.f32 %v1379, %v1419
      %v1452 = vmul.f32 %v1384, %v1420
      %v1453 = vmul.f32 %v1387, %v1421
      %v1454 = vpack.c.bf16 %v1423, %v1422
      %v1455 = vpack.c.bf16 %v1425, %v1424
      %v1456 = vpack.c.bf16 %v1427, %v1426
      %v1457 = vpack.c.bf16 %v1429, %v1428
      %v1458 = vpack.c.bf16 %v1431, %v1430
      %v1459 = vpack.c.bf16 %v1433, %v1432
      %v1460 = vpack.c.bf16 %v1435, %v1434
      %v1461 = vpack.c.bf16 %v1437, %v1436
      %v1462 = vpack.c.bf16 %v1439, %v1438
      %v1463 = vpack.c.bf16 %v1441, %v1440
      %v1464 = vpack.c.bf16 %v1443, %v1442
      %v1465 = vpack.c.bf16 %v1445, %v1444
      %v1466 = vpack.c.bf16 %v1447, %v1446
      %v1467 = vpack.c.bf16 %v1449, %v1448
      %v1468 = vpack.c.bf16 %v1451, %v1450
      %v1469 = vpack.c.bf16 %v1453, %v1452
      %v1470 = vld [vmem:[%s3] sm:$0x1]
      %v1471 = vld [vmem:[%s4] sm:$0x1]
      %v1473 = vlaneseq
      %v1474 = vshrl.u32 %v1473, 7
      %v1475 = vsub.s32 0, %v1474
      %v1476 = vrot.slane %v1471, %v1475
      %vm1478 = vcmask 15360
      %v1480 = vsel %vm1478, %v1454, 0
      %v1483 = vsel %vm1478, %v1455, 0
      %v1486 = vsel %vm1478, %v1456, 0
      %v1489 = vsel %vm1478, %v1457, 0
      %v1492 = vsel %vm1478, %v1458, 0
      %v1495 = vsel %vm1478, %v1459, 0
      %v1498 = vsel %vm1478, %v1460, 0
      %v1501 = vsel %vm1478, %v1461, 0
      %v1504 = vsel %vm1478, %v1462, 0
      %v1507 = vsel %vm1478, %v1463, 0
      %v1510 = vsel %vm1478, %v1464, 0
      %v1513 = vsel %vm1478, %v1465, 0
      %v1516 = vsel %vm1478, %v1466, 0
      %v1519 = vsel %vm1478, %v1467, 0
      %v1522 = vsel %vm1478, %v1468, 0
      %v1525 = vsel %vm1478, %v1469, 0
      %vm1527 = vcmask 1040384
      %v1529 = vsel %vm1527, %v1470, 0
      %1531 = vmatprep.subr.bf16.mxu0 0
      %1532 = vmatpush1.bf16.msra.mxu0 %v1529
      %1533 = vmatprep.subr.bf16.mxu0 0
      %1534 = vmatpush1.bf16.msra.mxu0 0
      %1535 = vmatprep.subr.bf16.mxu0 0
      %1536 = vmatpush1.bf16.msra.mxu0 0
      %1537 = vmatprep.subr.bf16.mxu0 0
      %1538 = vmatpush1.bf16.msra.mxu0 0
      %1539 = vmatprep.subr.bf16.mxu0 0
      %1540 = vmatpush1.bf16.msra.mxu0 0
      %1541 = vmatprep.subr.bf16.mxu0 0
      %1542 = vmatpush1.bf16.msra.mxu0 0
      %1543 = vmatprep.subr.bf16.mxu0 0
      %1544 = vmatpush1.bf16.msra.mxu0 0
      %1545 = vmatprep.subr.bf16.mxu0 0
      %1546 = vmatpush1.bf16.msra.mxu0 0
      %1547 = vmatprep.subr.bf16.mxu0 0
      %1548 = vmatpush1.bf16.msra.mxu0 0
      %1549 = vmatprep.subr.bf16.mxu0 0
      %1550 = vmatpush1.bf16.msra.mxu0 0
      %1551 = vmatprep.subr.bf16.mxu0 0
      %1552 = vmatpush1.bf16.msra.mxu0 0
      %1553 = vmatprep.subr.bf16.mxu0 0
      %1554 = vmatpush1.bf16.msra.mxu0 0
      %1555 = vmatprep.subr.bf16.mxu0 0
      %1556 = vmatpush1.bf16.msra.mxu0 0
      %1557 = vmatprep.subr.bf16.mxu0 0
      %1558 = vmatpush1.bf16.msra.mxu0 0
      %1559 = vmatprep.subr.bf16.mxu0 0
      %1560 = vmatpush1.bf16.msra.mxu0 0
      %1561 = vmatprep.subr.bf16.mxu0 0
      %1562 = vmatpush1.bf16.msra.mxu0 0
      %1563 = vmatprep.mubr.bf16.mxu0 0
      %1564 = vmatmul.mubr.bf16.gmra.mrb[0].mxu0 %v1480
      %v1565 = vpop.f32.mrb[0].mxu0
      %v1566 = vadd.f32 %v1476, %v1565
      %v1567 = vpop.f32.mrb[0].mxu0
      %v1568 = vpop.f32.mrb[0].mxu0
      %v1569 = vadd.f32 %v1476, %v1568
      %v1570 = vpop.f32.mrb[0].mxu0
      %1571 = vmatprep.mubr.bf16.mxu0 0
      %1572 = vmatmul.mubr.bf16.gmra.mrb[0].mxu0 %v1483
      %v1573 = vpop.f32.mrb[0].mxu0
      %v1574 = vadd.f32 %v1476, %v1573
      %v1575 = vpop.f32.mrb[0].mxu0
      %v1576 = vpop.f32.mrb[0].mxu0
      %v1577 = vadd.f32 %v1476, %v1576
      %v1578 = vpop.f32.mrb[0].mxu0
      %1579 = vmatprep.mubr.bf16.mxu0 0
      %1580 = vmatmul.mubr.bf16.gmra.mrb[0].mxu0 %v1486
      %v1581 = vpop.f32.mrb[0].mxu0
      %v1582 = vadd.f32 %v1476, %v1581
      %v1583 = vpop.f32.mrb[0].mxu0
      %v1584 = vpop.f32.mrb[0].mxu0
      %v1585 = vadd.f32 %v1476, %v1584
      %v1586 = vpop.f32.mrb[0].mxu0
      %1587 = vmatprep.mubr.bf16.mxu0 0
      %1588 = vmatmul.mubr.bf16.gmra.mrb[0].mxu0 %v1489
      %v1589 = vpop.f32.mrb[0].mxu0
      %v1590 = vadd.f32 %v1476, %v1589
      %v1591 = vpop.f32.mrb[0].mxu0
      %v1592 = vpop.f32.mrb[0].mxu0
      %v1593 = vadd.f32 %v1476, %v1592
      %v1594 = vpop.f32.mrb[0].mxu0
      %1595 = vmatprep.mubr.bf16.mxu0 0
      %1596 = vmatmul.mubr.bf16.gmra.mrb[0].mxu0 %v1492
      %v1597 = vpop.f32.mrb[0].mxu0
      %v1598 = vadd.f32 %v1476, %v1597
      %v1599 = vpop.f32.mrb[0].mxu0
      %v1600 = vpop.f32.mrb[0].mxu0
      %v1601 = vadd.f32 %v1476, %v1600
      %v1602 = vpop.f32.mrb[0].mxu0
      %1603 = vmatprep.mubr.bf16.mxu0 0
      %1604 = vmatmul.mubr.bf16.gmra.mrb[0].mxu0 %v1495
      %v1605 = vpop.f32.mrb[0].mxu0
      %v1606 = vadd.f32 %v1476, %v1605
      %v1607 = vpop.f32.mrb[0].mxu0
      %v1608 = vpop.f32.mrb[0].mxu0
      %v1609 = vadd.f32 %v1476, %v1608
      %v1610 = vpop.f32.mrb[0].mxu0
      %1611 = vmatprep.mubr.bf16.mxu0 0
      %1612 = vmatmul.mubr.bf16.gmra.mrb[0].mxu0 %v1498
      %v1613 = vpop.f32.mrb[0].mxu0
      %v1614 = vadd.f32 %v1476, %v1613
      %v1615 = vpop.f32.mrb[0].mxu0
      %v1616 = vpop.f32.mrb[0].mxu0
      %v1617 = vadd.f32 %v1476, %v1616
      %v1618 = vpop.f32.mrb[0].mxu0
      %1619 = vmatprep.mubr.bf16.mxu0 0
      %1620 = vmatmul.mubr.bf16.gmra.mrb[0].mxu0 %v1501
      %v1621 = vpop.f32.mrb[0].mxu0
      %v1622 = vadd.f32 %v1476, %v1621
      %v1623 = vpop.f32.mrb[0].mxu0
      %v1624 = vpop.f32.mrb[0].mxu0
      %v1625 = vadd.f32 %v1476, %v1624
      %v1626 = vpop.f32.mrb[0].mxu0
      %1627 = vmatprep.mubr.bf16.mxu0 0
      %1628 = vmatmul.mubr.bf16.gmra.mrb[0].mxu0 %v1504
      %v1629 = vpop.f32.mrb[0].mxu0
      %v1630 = vadd.f32 %v1476, %v1629
      %v1631 = vpop.f32.mrb[0].mxu0
      %v1632 = vpop.f32.mrb[0].mxu0
      %v1633 = vadd.f32 %v1476, %v1632
      %v1634 = vpop.f32.mrb[0].mxu0
      %1635 = vmatprep.mubr.bf16.mxu0 0
      %1636 = vmatmul.mubr.bf16.gmra.mrb[0].mxu0 %v1507
      %v1637 = vpop.f32.mrb[0].mxu0
      %v1638 = vadd.f32 %v1476, %v1637
      %v1639 = vpop.f32.mrb[0].mxu0
      %v1640 = vpop.f32.mrb[0].mxu0
      %v1641 = vadd.f32 %v1476, %v1640
      %v1642 = vpop.f32.mrb[0].mxu0
      %1643 = vmatprep.mubr.bf16.mxu0 0
      %1644 = vmatmul.mubr.bf16.gmra.mrb[0].mxu0 %v1510
      %v1645 = vpop.f32.mrb[0].mxu0
      %v1646 = vadd.f32 %v1476, %v1645
      %v1647 = vpop.f32.mrb[0].mxu0
      %v1648 = vpop.f32.mrb[0].mxu0
      %v1649 = vadd.f32 %v1476, %v1648
      %v1650 = vpop.f32.mrb[0].mxu0
      %1651 = vmatprep.mubr.bf16.mxu0 0
      %1652 = vmatmul.mubr.bf16.gmra.mrb[0].mxu0 %v1513
      %v1653 = vpop.f32.mrb[0].mxu0
      %v1654 = vadd.f32 %v1476, %v1653
      %v1655 = vpop.f32.mrb[0].mxu0
      %v1656 = vpop.f32.mrb[0].mxu0
      %v1657 = vadd.f32 %v1476, %v1656
      %v1658 = vpop.f32.mrb[0].mxu0
      %1659 = vmatprep.mubr.bf16.mxu0 0
      %1660 = vmatmul.mubr.bf16.gmra.mrb[0].mxu0 %v1516
      %v1661 = vpop.f32.mrb[0].mxu0
      %v1662 = vadd.f32 %v1476, %v1661
      %v1663 = vpop.f32.mrb[0].mxu0
      %v1664 = vpop.f32.mrb[0].mxu0
      %v1665 = vadd.f32 %v1476, %v1664
      %v1666 = vpop.f32.mrb[0].mxu0
      %1667 = vmatprep.mubr.bf16.mxu0 0
      %1668 = vmatmul.mubr.bf16.gmra.mrb[0].mxu0 %v1519
      %v1669 = vpop.f32.mrb[0].mxu0
      %v1670 = vadd.f32 %v1476, %v1669
      %v1671 = vpop.f32.mrb[0].mxu0
      %v1672 = vpop.f32.mrb[0].mxu0
      %v1673 = vadd.f32 %v1476, %v1672
      %v1674 = vpop.f32.mrb[0].mxu0
      %1675 = vmatprep.mubr.bf16.mxu0 0
      %1676 = vmatmul.mubr.bf16.gmra.mrb[0].mxu0 %v1522
      %v1677 = vpop.f32.mrb[0].mxu0
      %v1678 = vadd.f32 %v1476, %v1677
      %v1679 = vpop.f32.mrb[0].mxu0
      %v1680 = vpop.f32.mrb[0].mxu0
      %v1681 = vadd.f32 %v1476, %v1680
      %v1682 = vpop.f32.mrb[0].mxu0
      %1683 = vmatprep.mubr.bf16.mxu0 0
      %1684 = vmatmul.mubr.bf16.gmra.mrb[0].mxu0 %v1525
      %v1685 = vpop.f32.mrb[0].mxu0
      %v1686 = vadd.f32 %v1476, %v1685
      %v1687 = vpop.f32.mrb[0].mxu0
      %v1688 = vpop.f32.mrb[0].mxu0
      %v1689 = vadd.f32 %v1476, %v1688
      %v1690 = vpop.f32.mrb[0].mxu0
      %1691 = vdwg.mxu0
      %v1692 = vadd.f32 %v1566, %v598
      %v1693 = vadd.f32 %v1569, %v599
      %v1694 = vadd.f32 %v1574, %v600
      %v1695 = vadd.f32 %v1577, %v601
      %v1696 = vadd.f32 %v1582, %v602
      %v1697 = vadd.f32 %v1585, %v603
      %v1698 = vadd.f32 %v1590, %v604
      %v1699 = vadd.f32 %v1593, %v605
      %v1700 = vadd.f32 %v1598, %v606
      %v1701 = vadd.f32 %v1601, %v607
      %v1702 = vadd.f32 %v1606, %v608
      %v1703 = vadd.f32 %v1609, %v609
      %v1704 = vadd.f32 %v1614, %v610
      %v1705 = vadd.f32 %v1617, %v611
      %v1706 = vadd.f32 %v1622, %v612
      %v1707 = vadd.f32 %v1625, %v613
      %v1708 = vadd.f32 %v1630, %v614
      %v1709 = vadd.f32 %v1633, %v615
      %v1710 = vadd.f32 %v1638, %v616
      %v1711 = vadd.f32 %v1641, %v617
      %v1712 = vadd.f32 %v1646, %v618
      %v1713 = vadd.f32 %v1649, %v619
      %v1714 = vadd.f32 %v1654, %v620
      %v1715 = vadd.f32 %v1657, %v621
      %v1716 = vadd.f32 %v1662, %v622
      %v1717 = vadd.f32 %v1665, %v623
      %v1718 = vadd.f32 %v1670, %v624
      %v1719 = vadd.f32 %v1673, %v625
      %v1720 = vadd.f32 %v1678, %v626
      %v1721 = vadd.f32 %v1681, %v627
      %v1722 = vadd.f32 %v1686, %v628
      %v1723 = vadd.f32 %v1689, %v629
      %1724 = vst.msk [vmem:[%s246] sm:$0xff] %vm650, %v1692
      %1725 = vst.msk [vmem:[%s246 + $0x8] sm:$0xff] %vm650, %v1693
      %1726 = vst.msk [vmem:[%s246 + $0x10] sm:$0xff] %vm650, %v1694
      %1727 = vst.msk [vmem:[%s246 + $0x18] sm:$0xff] %vm650, %v1695
      %1728 = vst.msk [vmem:[%s246 + $0x20] sm:$0xff] %vm650, %v1696
      %1729 = vst.msk [vmem:[%s246 + $0x28] sm:$0xff] %vm650, %v1697
      %1730 = vst.msk [vmem:[%s246 + $0x30] sm:$0xff] %vm650, %v1698
      %1731 = vst.msk [vmem:[%s246 + $0x38] sm:$0xff] %vm650, %v1699
      %1732 = vst.msk [vmem:[%s246 + $0x40] sm:$0xff] %vm650, %v1700
      %1733 = vst.msk [vmem:[%s246 + $0x48] sm:$0xff] %vm650, %v1701
      %1734 = vst.msk [vmem:[%s246 + $0x50] sm:$0xff] %vm650, %v1702
      %1735 = vst.msk [vmem:[%s246 + $0x58] sm:$0xff] %vm650, %v1703
      %1736 = vst.msk [vmem:[%s246 + $0x60] sm:$0xff] %vm650, %v1704
      %1737 = vst.msk [vmem:[%s246 + $0x68] sm:$0xff] %vm650, %v1705
      %1738 = vst.msk [vmem:[%s246 + $0x70] sm:$0xff] %vm650, %v1706
      %1739 = vst.msk [vmem:[%s246 + $0x78] sm:$0xff] %vm650, %v1707
      %1740 = vst.msk [vmem:[%s246 + $0x80] sm:$0xff] %vm650, %v1708
      %1741 = vst.msk [vmem:[%s246 + $0x88] sm:$0xff] %vm650, %v1709
      %1742 = vst.msk [vmem:[%s246 + $0x90] sm:$0xff] %vm650, %v1710
      %1743 = vst.msk [vmem:[%s246 + $0x98] sm:$0xff] %vm650, %v1711
      %1744 = vst.msk [vmem:[%s246 + $0xa0] sm:$0xff] %vm650, %v1712
      %1745 = vst.msk [vmem:[%s246 + $0xa8] sm:$0xff] %vm650, %v1713
      %1746 = vst.msk [vmem:[%s246 + $0xb0] sm:$0xff] %vm650, %v1714
      %1747 = vst.msk [vmem:[%s246 + $0xb8] sm:$0xff] %vm650, %v1715
      %1748 = vst.msk [vmem:[%s246 + $0xc0] sm:$0xff] %vm650, %v1716
      %1749 = vst.msk [vmem:[%s246 + $0xc8] sm:$0xff] %vm650, %v1717
      %1750 = vst.msk [vmem:[%s246 + $0xd0] sm:$0xff] %vm650, %v1718
      %1751 = vst.msk [vmem:[%s246 + $0xd8] sm:$0xff] %vm650, %v1719
      %1752 = vst.msk [vmem:[%s246 + $0xe0] sm:$0xff] %vm650, %v1720
      %1753 = vst.msk [vmem:[%s246 + $0xe8] sm:$0xff] %vm650, %v1721
      %1754 = vst.msk [vmem:[%s246 + $0xf0] sm:$0xff] %vm650, %v1722
      %1755 = vst.msk [vmem:[%s246 + $0xf8] sm:$0xff] %vm650, %v1723
      %s1756 = smul.u32 32, %s21
      %p1757 = scmp.lt.s32.totalorder %s20, 1
      %s1758 = scalar_select %p1757, %s20, 1
      %p1759 = scmp.lt.s32.totalorder %s1756, 31
      %s1760 = scalar_select %p1759, %s1756, 31
      %s1761 = smul.addr %s1758, 32
      %s1762 = sadd.s32 %s1760, %s1761
      %s1763 = smul.addr %s1762, 8
      %s1764 = scalar_lea.vmem %s5, %s1763
      // Predicated region
      $region45: #{tpu_custom_call.1} parent=39 // pred_check
        %p1765 = pneg %p158
      $region46: #{tpu_custom_call.1} parent=39 // pred_check_branch
        %1767 = sbr.rel (%p1765) target = $region48
      $region47: #{tpu_custom_call.1} parent=39 // pred_region
        %s1768 = smul.u32 32, %s21
      $region48: #{tpu_custom_call.1} parent=39 // pred_fallthru
        _
    $region40: #{tpu_custom_call.1} parent=5 // pred_fallthru
      _
    %p1769 = scmp.le.s32.totalorder 2, %s11
    // Predicated region
    $region49: #{tpu_custom_call.1} parent=5 // pred_check
      %p1770 = pneg %p1769
    $region50: #{tpu_custom_call.1} parent=5 // pred_check_branch
      %1772 = sbr.rel (%p1770) target = $region52
    $region51: #{tpu_custom_call.1} parent=5 // pred_region
      %s1773 = ssub.s32 %s11, 2
      // Predicated region
      $region53: #{tpu_custom_call.1} parent=51 // pred_check
        %p1774 = pneg %p164
      $region54: #{tpu_custom_call.1} parent=51 // pred_check_branch
        %1776 = sbr.rel (%p1774) target = $region56
      $region55: #{tpu_custom_call.1} parent=51 // pred_region
        %s1777 = smul.u32 32, %s23
        %p1778 = scmp.lt.s32.totalorder %s22, 1
        %s1779 = scalar_select %p1778, %s22, 1
        %p1780 = scmp.lt.s32.totalorder %s1777, 31
        %s1781 = scalar_select %p1780, %s1777, 31
        %s1782 = smul.addr %s1779, 32
        %s1783 = sadd.s32 %s1781, %s1782
        %s1784 = smul.addr %s1783, 8
        %s1785 = scalar_lea.vmem %s5, %s1784
      $region56: #{tpu_custom_call.1} parent=51 // pred_fallthru
        _
    $region52: #{tpu_custom_call.1} parent=5 // pred_fallthru
      _
  $region6: #{tpu_custom_call.1} parent=0 // loop_footer
    %s15 = sadd.s32 1, %s11
  $region7: #{tpu_custom_call.1} parent=0 // loop_footer_branch
    %10 = sbr.rel target = $region3
  $region8: #{tpu_custom_call.1} parent=0 // loop_exit
    _

</llo_original>
